<compile_context>
chip_gen: v6e
topology: v6e:2x2x1
jax: 0.10.0
libtpu: 0.0.40
codegen_flags: <defaults>
</compile_context>

<pallas_src>
import functools

import jax
import jax.numpy as jnp
from jax.experimental import pallas as pl
from jax.experimental.pallas import tpu as pltpu

LN_EPS = 1e-5
# Explicit scoped-VMEM budget: safe on every generation (v5e default is only
# 16 MiB, v7x has 64 MiB physical -> stay well under it).
VMEM_LIMIT = 32 * 1024 * 1024


# --------------------------------------------------------------------------
# Kernel 1: channel LayerNorm per pixel + fused q/k/v 1x1-conv projection.
#   x_ref : (C, block_n)   w_ref : (2*qk_dim+dim, C) bf16
#   outputs: q (qk_dim, block_n), k (qk_dim, block_n), v (dim, block_n)
# --------------------------------------------------------------------------
def _ln_qkv_kernel(x_ref, lnw_ref, lnb_ref, w_ref, q_ref, k_ref, v_ref, *,
                   qk_dim):
    x = x_ref[...]                                        # (C, bn) f32
    mu = jnp.mean(x, axis=0, keepdims=True)               # sublane reduce
    var = jnp.mean((x - mu) ** 2, axis=0, keepdims=True)
    xn = (x - mu) * jax.lax.rsqrt(var + LN_EPS)
    xn = xn * lnw_ref[...] + lnb_ref[...]                 # LN affine (f32 VPU)
    # One fused projection matmul on the MXU: bf16 operands, f32 accumulate.
    qkv = jnp.dot(w_ref[...], xn.astype(jnp.bfloat16),
                  preferred_element_type=jnp.float32)     # (2qk+dim, bn)
    q_ref[...] = qkv[:qk_dim]
    k_ref[...] = qkv[qk_dim:2 * qk_dim]
    v_ref[...] = qkv[2 * qk_dim:]


def ln_qkv(x_cm, ln_w, ln_b, w_fused_bf16, qk_dim, *, max_block_n=1024):
    C, N = x_cm.shape
    tot = w_fused_bf16.shape[0]
    dim = tot - 2 * qk_dim
    bn = N if N <= max_block_n else max_block_n           # lane-dense tiles
    kern = functools.partial(_ln_qkv_kernel, qk_dim=qk_dim)
    return pl.pallas_call(
        kern,
        out_shape=(jax.ShapeDtypeStruct((qk_dim, N), jnp.float32),
                   jax.ShapeDtypeStruct((qk_dim, N), jnp.float32),
                   jax.ShapeDtypeStruct((dim, N), jnp.float32)),
        grid=(pl.cdiv(N, bn),),
        in_specs=[pl.BlockSpec((C, bn), lambda i: (0, i)),
                  pl.BlockSpec((C, 1), lambda i: (0, 0)),
                  pl.BlockSpec((C, 1), lambda i: (0, 0)),
                  pl.BlockSpec((tot, C), lambda i: (0, 0))],
        out_specs=(pl.BlockSpec((qk_dim, bn), lambda i: (0, i)),
                   pl.BlockSpec((qk_dim, bn), lambda i: (0, i)),
                   pl.BlockSpec((dim, bn), lambda i: (0, i))),
        compiler_params=pltpu.CompilerParams(
            dimension_semantics=("parallel",),
            vmem_limit_bytes=VMEM_LIMIT),
    )(x_cm, ln_w.reshape(C, 1), ln_b.reshape(C, 1), w_fused_bf16)


# --------------------------------------------------------------------------
# Kernel 2: per-superpixel masked attention, superpixels on lanes.
#   q/k/v refs : (heads, topk, head_dim, block_k)   mask/sims : (topk, block_k)
#   All math stays f32 on the VPU/EUP (v5e has no bf16 VPU).
# --------------------------------------------------------------------------
def _spattn_kernel(q_ref, k_ref, v_ref, mask_ref, sims_ref, o_ref, *,
                   scale, kweight, out_weight):
    heads, topk, hd_qk, _ = q_ref.shape
    m = mask_ref[...][None, :, None, :]                   # (1, topk, 1, bk)
    w = sims_ref[...][None, :, None, :]
    q = q_ref[...]                                        # q-mask is redundant
    k_ = k_ref[...] * m
    v_ = v_ref[...] * m

    # attn[h, t, s, bk] = sum_c q[h, t, c, bk] * k[h, s, c, bk]
    attn = q[:, :, None, 0, :] * k_[:, None, :, 0, :]
    for c in range(1, hd_qk):
        attn = attn + q[:, :, None, c, :] * k_[:, None, :, c, :]
    attn = attn * scale

    attn = attn - jnp.max(attn, axis=2, keepdims=True)    # sublane reduce
    attn = jnp.exp(attn)                                  # EUP
    attn = attn * pl.reciprocal(jnp.sum(attn, axis=2, keepdims=True),
                                approx=True)              # EUP reciprocal

    if kweight:
        v_ = v_ * w
    # out[h, t, c, bk] = sum_s attn[h, t, s, bk] * v[h, s, c, bk]
    out = attn[:, :, 0, :][:, :, None, :] * v_[:, 0, :, :][:, None, :, :]
    for s in range(1, topk):
        out = out + attn[:, :, s, :][:, :, None, :] * v_[:, s, :, :][:, None, :, :]
    if out_weight:
        out = out * w
    o_ref[...] = out * m


def spattn(qg, kg, vg, mask_t, sims_t, *, scale, kweight, out_weight,
           max_block_k=512):
    heads, topk, hd_qk, K = qg.shape
    hd_v = vg.shape[2]
    bk = K if K <= max_block_k else max_block_k
    kern = functools.partial(_spattn_kernel, scale=scale,
                             kweight=kweight, out_weight=out_weight)
    spec4 = lambda hd: pl.BlockSpec((heads, topk, hd, bk),
                                    lambda i: (0, 0, 0, i))
    spec2 = pl.BlockSpec((topk, bk), lambda i: (0, i))
    return pl.pallas_call(
        kern,
        out_shape=jax.ShapeDtypeStruct((heads, topk, hd_v, K), jnp.float32),
        grid=(pl.cdiv(K, bk),),
        in_specs=[spec4(hd_qk), spec4(hd_qk), spec4(hd_v), spec2, spec2],
        out_specs=spec4(hd_v),
        compiler_params=pltpu.CompilerParams(
            dimension_semantics=("parallel",),
            vmem_limit_bytes=VMEM_LIMIT),
    )(qg, kg, vg, mask_t, sims_t)


# --------------------------------------------------------------------------
# Kernel 3: scatter-add of out2 (dim, K*topk) onto v (dim, N) along columns.
#   Implemented as an MXU contraction with an in-kernel one-hot matrix built
#   from the flattened indices (duplicates sum correctly); v is aliased to
#   the output so XLA inserts no defensive copy.
# --------------------------------------------------------------------------
def _scatter_add_kernel(idx_ref, out2_ref, v_ref, o_ref):
    kt = idx_ref.shape[0]
    bn = v_ref.shape[1]
    pix0 = pl.program_id(0) * bn
    iota = jax.lax.broadcasted_iota(jnp.int32, (kt, bn), 1) + pix0
    onehot = (idx_ref[...] == iota).astype(jnp.bfloat16)        # exact in bf16
    acc = jnp.dot(out2_ref[...].astype(jnp.bfloat16), onehot,
                  preferred_element_type=jnp.float32)            # (dim, bn)
    o_ref[...] = v_ref[...] + acc


def scatter_add_cols(v_cm, out2, flat_idx, *, max_block_n=512):
    dim, N = v_cm.shape
    kt = flat_idx.shape[0]
    bn = N if N <= max_block_n else max_block_n
    return pl.pallas_call(
        _scatter_add_kernel,
        out_shape=jax.ShapeDtypeStruct((dim, N), jnp.float32),
        grid=(pl.cdiv(N, bn),),
        in_specs=[pl.BlockSpec((kt, 1), lambda i: (0, 0)),
                  pl.BlockSpec((dim, kt), lambda i: (0, 0)),
                  pl.BlockSpec((dim, bn), lambda i: (0, i))],
        out_specs=pl.BlockSpec((dim, bn), lambda i: (0, i)),
        input_output_aliases={2: 0},                       # accumulate onto v
        compiler_params=pltpu.CompilerParams(
            dimension_semantics=("parallel",),
            vmem_limit_bytes=VMEM_LIMIT),
    )(flat_idx.reshape(kt, 1).astype(jnp.int32), out2, v_cm)


# --------------------------------------------------------------------------
# Full forward (glue + kernels).
# --------------------------------------------------------------------------
def sp_intra_att_v3(x, affinity, params, *, num_heads, qk_dim, topk,
                    kweight=True, out_weight=True):
    B, C, H, W = x.shape
    assert B == 1, "reference module's mask reshape assumes B == 1"
    dim = C
    N = H * W
    K = affinity.shape[1]                                  # num_spixels
    ln_w, ln_b, wq, wk, wv = params                        # wq: (qk_dim, dim)

    # Channels-major layout: NCHW (B==1) is already (C, N), no transpose.
    x_cm = x.reshape(C, N)
    w_fused = jnp.concatenate([wq, wk, wv], axis=0).astype(jnp.bfloat16)
    q_cm, k_cm, v_cm = ln_qkv(x_cm, ln_w, ln_b, w_fused, qk_dim)

    # ---- glue: top-k / labels / mask (data-dependent, left to XLA) ----
    aff = affinity[0]                                      # (K, N)
    sims, indices = jax.lax.top_k(aff, topk)               # (K, topk)
    labels = jnp.argmax(aff, axis=0)                       # (N,) pixel->spixel
    mask = (labels[indices] == jnp.arange(K)[:, None]).astype(jnp.float32)

    hd_qk = qk_dim // num_heads
    hd_v = dim // num_heads
    scale = hd_qk ** (-0.5)
    flat_idx = indices.reshape(-1)                         # (K*topk,)

    # TODO(synk): fuse this gather into spattn via scalar-prefetched indices.
    def gather(f_cm, hd):                                  # f_cm: (heads*hd, N)
        g = f_cm[:, flat_idx].reshape(num_heads, hd, K, topk)
        return jnp.transpose(g, (0, 3, 1, 2))              # (heads, topk, hd, K)

    qg = gather(q_cm, hd_qk)
    kg = gather(k_cm, hd_qk)
    vg = gather(v_cm, hd_v)

    out_g = spattn(qg, kg, vg, mask.T, sims.T, scale=scale,
                   kweight=kweight, out_weight=out_weight)  # (h, topk, hd_v, K)

    # rearrange 'b k h t c -> b (h c) (k t)'
    out2 = jnp.transpose(out_g, (0, 2, 3, 1)).reshape(dim, K * topk)

    # weighted_scatter_mean(v, ..., normz=False) == scatter_add onto v.
    out_cm = scatter_add_cols(v_cm, out2, flat_idx)         # (dim, N)
    return out_cm.reshape(1, C, H, W)


# --------------------------------------------------------------------------
# Pure-JAX reference (original math, incl. the redundant q mask).  The q/k/v
# projection mirrors the kernel's bf16-operand / f32-accumulate MXU policy.
# --------------------------------------------------------------------------
def reference_forward(x, affinity, params, *, num_heads, qk_dim, topk,
                      kweight=True, out_weight=True):
    B, C, H, W = x.shape
    dim = C
    N = H * W
    K = affinity.shape[1]
    ln_w, ln_b, wq, wk, wv = params
    xf = jnp.transpose(x.reshape(B, C, N)[0])              # (N, C)
    mu = xf.mean(-1, keepdims=True)
    var = ((xf - mu) ** 2).mean(-1, keepdims=True)
    xn = (xf - mu) / jnp.sqrt(var + LN_EPS) * ln_w + ln_b
    xb = xn.astype(jnp.bfloat16)
    proj = lambda w: jnp.dot(xb, w.T.astype(jnp.bfloat16),
                             preferred_element_type=jnp.float32)
    q, k, v = proj(wq), proj(wk), proj(wv)
    sims, indices = jax.lax.top_k(affinity[0], topk)
    labels = jnp.argmax(affinity[0], axis=0)
    lids = jnp.arange(K)[:, None]
    mask = (labels[indices] == lids).astype(jnp.float32)
    hd_qk = qk_dim // num_heads
    hd_v = dim // num_heads
    gath = lambda f, hd: jnp.transpose(
        f[indices].reshape(K, topk, num_heads, hd), (0, 2, 1, 3))
    m4 = mask[:, None, :, None]
    qg, kg, vg = gath(q, hd_qk) * m4, gath(k, hd_qk) * m4, gath(v, hd_v) * m4
    attn = jnp.einsum('khtc,khsc->khts', qg, kg) * (hd_qk ** -0.5)
    attn = jax.nn.softmax(attn, axis=-1)
    w4 = sims[:, None, :, None]
    if kweight:
        vg = w4 * vg
    out = jnp.einsum('khts,khsc->khtc', attn, vg)
    if out_weight:
        out = w4 * out
    out = m4 * out
    out2 = jnp.transpose(out, (1, 3, 0, 2)).reshape(dim, K * topk)
    res = jnp.transpose(v).at[:, indices.reshape(-1)].add(out2)
    return res.reshape(1, C, H, W)


if __name__ == "__main__":
    # Module hyper-parameters (small, consistent with the forward; B must be 1).
    B, C, H, W = 1, 8, 16, 16          # dim = C = 8
    dim, qk_dim, num_heads, topk = C, 8, 2, 8
    num_spixels = 16                   # K

    key = jax.random.PRNGKey(0)
    kx, ka, k1, k2, k3, k4, k5 = jax.random.split(key, 7)

    x = jax.random.normal(kx, (B, C, H, W), jnp.float32)
    affinity = jax.random.normal(ka, (B, num_spixels, H * W), jnp.float32)

    # Deterministic parameter init (Conv2d 1x1 weights, LayerNorm2d affine).
    ln_w = 1.0 + 0.1 * jax.random.normal(k1, (dim,), jnp.float32)
    ln_b = 0.1 * jax.random.normal(k2, (dim,), jnp.float32)
    wq = 0.2 * jax.random.normal(k3, (qk_dim, dim), jnp.float32)
    wk = 0.2 * jax.random.normal(k4, (qk_dim, dim), jnp.float32)
    wv = 0.2 * jax.random.normal(k5, (dim, dim), jnp.float32)
    params = (ln_w, ln_b, wq, wk, wv)

    fwd = jax.jit(functools.partial(sp_intra_att_v3, num_heads=num_heads,
                                    qk_dim=qk_dim, topk=topk))
    out = jax.block_until_ready(fwd(x, affinity, params))

    ref = jax.block_until_ready(reference_forward(
        x, affinity, params, num_heads=num_heads, qk_dim=qk_dim, topk=topk))

    assert out.shape == (B, C, H, W)
    # bf16 MXU operands + EUP approx reciprocal in the kernels -> 2e-2 tol.
    assert jnp.allclose(out, ref, rtol=2e-2, atol=2e-2), "mismatch vs reference"
    print("KERNEL_OK")
</pallas_src>

<mosaic_0001>
module attributes {stable_mosaic.version = 11 : i64} {
  func.func @_ln_qkv_kernel(%arg0: i32, %arg1: memref<8x256xf32, #tpu.memory_space<vmem>>, %arg2: memref<8x1xf32, #tpu.memory_space<vmem>>, %arg3: memref<8x1xf32, #tpu.memory_space<vmem>>, %arg4: memref<24x8xbf16, #tpu.memory_space<vmem>>, %arg5: memref<8x256xf32, #tpu.memory_space<vmem>>, %arg6: memref<8x256xf32, #tpu.memory_space<vmem>>, %arg7: memref<8x256xf32, #tpu.memory_space<vmem>>) attributes {dimension_semantics = [#tpu.dimension_semantics<parallel>], iteration_bounds = array<i64: 1>, scalar_prefetch = 0 : i64, scratch_operands = 0 : i64, tpu.core_type = #tpu.core_type<tc>, window_params = [{transform_indices = @transform_0, window_bounds = array<i64: 8, 256>}, {pipeline_mode = #tpu.pipeline_mode<synchronous>, transform_indices = @transform_1, window_bounds = array<i64: 8, 1>}, {pipeline_mode = #tpu.pipeline_mode<synchronous>, transform_indices = @transform_2, window_bounds = array<i64: 8, 1>}, {pipeline_mode = #tpu.pipeline_mode<synchronous>, transform_indices = @transform_3, window_bounds = array<i64: 24, 8>}, {transform_indices = @transform_4, window_bounds = array<i64: 8, 256>}, {transform_indices = @transform_5, window_bounds = array<i64: 8, 256>}, {transform_indices = @transform_6, window_bounds = array<i64: 8, 256>}]} {
    %c0 = arith.constant 0 : index
    %c0_0 = arith.constant 0 : index
    %0 = vector.load %arg1[%c0, %c0_0] : memref<8x256xf32, #tpu.memory_space<vmem>>, vector<8x256xf32>
    %cst = arith.constant dense<0.000000e+00> : vector<256xf32>
    %1 = vector.multi_reduction <add>, %0, %cst [0] : vector<8x256xf32> to vector<256xf32>
    %2 = vector.shape_cast %1 : vector<256xf32> to vector<1x256xf32>
    %cst_1 = arith.constant 8.000000e+00 : f32
    %3 = vector.broadcast %cst_1 : f32 to vector<1x256xf32>
    %4 = arith.divf %2, %3 : vector<1x256xf32>
    %5 = vector.broadcast %4 : vector<1x256xf32> to vector<8x256xf32>
    %6 = arith.subf %0, %5 : vector<8x256xf32>
    %7 = arith.mulf %6, %6 : vector<8x256xf32>
    %cst_2 = arith.constant dense<0.000000e+00> : vector<256xf32>
    %8 = vector.multi_reduction <add>, %7, %cst_2 [0] : vector<8x256xf32> to vector<256xf32>
    %9 = vector.shape_cast %8 : vector<256xf32> to vector<1x256xf32>
    %cst_3 = arith.constant 8.000000e+00 : f32
    %10 = vector.broadcast %cst_3 : f32 to vector<1x256xf32>
    %11 = arith.divf %9, %10 : vector<1x256xf32>
    %12 = vector.broadcast %4 : vector<1x256xf32> to vector<8x256xf32>
    %13 = arith.subf %0, %12 : vector<8x256xf32>
    %cst_4 = arith.constant 9.99999974E-6 : f32
    %14 = vector.broadcast %cst_4 : f32 to vector<1x256xf32>
    %15 = arith.addf %11, %14 : vector<1x256xf32>
    %16 = math.rsqrt %15 : vector<1x256xf32>
    %17 = vector.broadcast %16 : vector<1x256xf32> to vector<8x256xf32>
    %18 = arith.mulf %13, %17 : vector<8x256xf32>
    %c0_5 = arith.constant 0 : index
    %c0_6 = arith.constant 0 : index
    %19 = vector.load %arg2[%c0_5, %c0_6] : memref<8x1xf32, #tpu.memory_space<vmem>>, vector<8x1xf32>
    %20 = vector.broadcast %19 : vector<8x1xf32> to vector<8x256xf32>
    %21 = arith.mulf %18, %20 : vector<8x256xf32>
    %c0_7 = arith.constant 0 : index
    %c0_8 = arith.constant 0 : index
    %22 = vector.load %arg3[%c0_7, %c0_8] : memref<8x1xf32, #tpu.memory_space<vmem>>, vector<8x1xf32>
    %23 = vector.broadcast %22 : vector<8x1xf32> to vector<8x256xf32>
    %24 = arith.addf %21, %23 : vector<8x256xf32>
    %c0_9 = arith.constant 0 : index
    %c0_10 = arith.constant 0 : index
    %25 = vector.load %arg4[%c0_9, %c0_10] : memref<24x8xbf16, #tpu.memory_space<vmem>>, vector<24x8xbf16>
    %26 = arith.truncf %24 : vector<8x256xf32> to vector<8x256xbf16>
    %cst_11 = arith.constant dense<0.000000e+00> : vector<24x256xf32>
    %27 = tpu.matmul %25, %26, %cst_11 {dimension_numbers = #tpu.dot_dimension_numbers<[1], [0], [0], [1], [0, 0, 1, 1], [], []>} : vector<24x8xbf16>, vector<8x256xbf16>, vector<24x256xf32> -> vector<24x256xf32>
    %28 = vector.extract_strided_slice %27 {offsets = [0, 0], sizes = [8, 256], strides = [1, 1]} : vector<24x256xf32> to vector<8x256xf32>
    %c0_12 = arith.constant 0 : index
    %c0_13 = arith.constant 0 : index
    %29 = vector.load %arg5[%c0_12, %c0_13] : memref<8x256xf32, #tpu.memory_space<vmem>>, vector<8x256xf32>
    tpu.vector_store %arg5[%c0_12, %c0_13], %28 {strides = array<i32>} : memref<8x256xf32, #tpu.memory_space<vmem>>, vector<8x256xf32>,
    %30 = vector.extract_strided_slice %27 {offsets = [8, 0], sizes = [8, 256], strides = [1, 1]} : vector<24x256xf32> to vector<8x256xf32>
    %c0_14 = arith.constant 0 : index
    %c0_15 = arith.constant 0 : index
    %31 = vector.load %arg6[%c0_14, %c0_15] : memref<8x256xf32, #tpu.memory_space<vmem>>, vector<8x256xf32>
    tpu.vector_store %arg6[%c0_14, %c0_15], %30 {strides = array<i32>} : memref<8x256xf32, #tpu.memory_space<vmem>>, vector<8x256xf32>,
    %32 = vector.extract_strided_slice %27 {offsets = [16, 0], sizes = [8, 256], strides = [1, 1]} : vector<24x256xf32> to vector<8x256xf32>
    %c0_16 = arith.constant 0 : index
    %c0_17 = arith.constant 0 : index
    %33 = vector.load %arg7[%c0_16, %c0_17] : memref<8x256xf32, #tpu.memory_space<vmem>>, vector<8x256xf32>
    tpu.vector_store %arg7[%c0_16, %c0_17], %32 {strides = array<i32>} : memref<8x256xf32, #tpu.memory_space<vmem>>, vector<8x256xf32>,
    return
  }
  func.func @transform_0(%arg0: i32) -> (i32, i32) {
    %c0_i32 = arith.constant 0 : i32
    %c0_i32_0 = arith.constant 0 : i32
    return %c0_i32, %arg0 : i32, i32
  }
  func.func @transform_1(%arg0: i32) -> (i32, i32) {
    %c0_i32 = arith.constant 0 : i32
    %c0_i32_0 = arith.constant 0 : i32
    %c0_i32_1 = arith.constant 0 : i32
    return %c0_i32, %c0_i32_0 : i32, i32
  }
  func.func @transform_2(%arg0: i32) -> (i32, i32) {
    %c0_i32 = arith.constant 0 : i32
    %c0_i32_0 = arith.constant 0 : i32
    %c0_i32_1 = arith.constant 0 : i32
    return %c0_i32, %c0_i32_0 : i32, i32
  }
  func.func @transform_3(%arg0: i32) -> (i32, i32) {
    %c0_i32 = arith.constant 0 : i32
    %c0_i32_0 = arith.constant 0 : i32
    %c0_i32_1 = arith.constant 0 : i32
    return %c0_i32, %c0_i32_0 : i32, i32
  }
  func.func @transform_4(%arg0: i32) -> (i32, i32) {
    %c0_i32 = arith.constant 0 : i32
    %c0_i32_0 = arith.constant 0 : i32
    return %c0_i32, %arg0 : i32, i32
  }
  func.func @transform_5(%arg0: i32) -> (i32, i32) {
    %c0_i32 = arith.constant 0 : i32
    %c0_i32_0 = arith.constant 0 : i32
    return %c0_i32, %arg0 : i32, i32
  }
  func.func @transform_6(%arg0: i32) -> (i32, i32) {
    %c0_i32 = arith.constant 0 : i32
    %c0_i32_0 = arith.constant 0 : i32
    return %c0_i32, %arg0 : i32, i32
  }
}

module attributes {stable_mosaic.version = 11 : i64} {
  func.func @_spattn_kernel(%arg0: i32, %arg1: memref<2x8x4x16xf32, #tpu.memory_space<vmem>>, %arg2: memref<2x8x4x16xf32, #tpu.memory_space<vmem>>, %arg3: memref<2x8x4x16xf32, #tpu.memory_space<vmem>>, %arg4: memref<8x16xf32, #tpu.memory_space<vmem>>, %arg5: memref<8x16xf32, #tpu.memory_space<vmem>>, %arg6: memref<2x8x4x16xf32, #tpu.memory_space<vmem>>) attributes {dimension_semantics = [#tpu.dimension_semantics<parallel>], iteration_bounds = array<i64: 1>, scalar_prefetch = 0 : i64, scratch_operands = 0 : i64, tpu.core_type = #tpu.core_type<tc>, window_params = [{transform_indices = @transform_0, window_bounds = array<i64: 2, 8, 4, 16>}, {transform_indices = @transform_1, window_bounds = array<i64: 2, 8, 4, 16>}, {transform_indices = @transform_2, window_bounds = array<i64: 2, 8, 4, 16>}, {transform_indices = @transform_3, window_bounds = array<i64: 8, 16>}, {transform_indices = @transform_4, window_bounds = array<i64: 8, 16>}, {transform_indices = @transform_5, window_bounds = array<i64: 2, 8, 4, 16>}]} {
    %c0 = arith.constant 0 : index
    %c0_0 = arith.constant 0 : index
    %0 = vector.load %arg4[%c0, %c0_0] : memref<8x16xf32, #tpu.memory_space<vmem>>, vector<8x16xf32>
    %1 = vector.shape_cast %0 : vector<8x16xf32> to vector<1x8x1x16xf32>
    %c0_1 = arith.constant 0 : index
    %c0_2 = arith.constant 0 : index
    %2 = vector.load %arg5[%c0_1, %c0_2] : memref<8x16xf32, #tpu.memory_space<vmem>>, vector<8x16xf32>
    %3 = vector.shape_cast %2 : vector<8x16xf32> to vector<1x8x1x16xf32>
    %c0_3 = arith.constant 0 : index
    %c0_4 = arith.constant 0 : index
    %c0_5 = arith.constant 0 : index
    %c0_6 = arith.constant 0 : index
    %4 = vector.load %arg1[%c0_3, %c0_4, %c0_5, %c0_6] : memref<2x8x4x16xf32, #tpu.memory_space<vmem>>, vector<2x8x4x16xf32>
    %c0_7 = arith.constant 0 : index
    %c0_8 = arith.constant 0 : index
    %c0_9 = arith.constant 0 : index
    %c0_10 = arith.constant 0 : index
    %5 = vector.load %arg2[%c0_7, %c0_8, %c0_9, %c0_10] : memref<2x8x4x16xf32, #tpu.memory_space<vmem>>, vector<2x8x4x16xf32>
    %6 = vector.broadcast %1 : vector<1x8x1x16xf32> to vector<2x8x4x16xf32>
    %7 = arith.mulf %5, %6 : vector<2x8x4x16xf32>
    %c0_11 = arith.constant 0 : index
    %c0_12 = arith.constant 0 : index
    %c0_13 = arith.constant 0 : index
    %c0_14 = arith.constant 0 : index
    %8 = vector.load %arg3[%c0_11, %c0_12, %c0_13, %c0_14] : memref<2x8x4x16xf32, #tpu.memory_space<vmem>>, vector<2x8x4x16xf32>
    %9 = vector.broadcast %1 : vector<1x8x1x16xf32> to vector<2x8x4x16xf32>
    %10 = arith.mulf %8, %9 : vector<2x8x4x16xf32>
    %11 = vector.extract_strided_slice %4 {offsets = [0, 0, 0, 0], sizes = [2, 8, 1, 16], strides = [1, 1, 1, 1]} : vector<2x8x4x16xf32> to vector<2x8x1x16xf32>
    %12 = vector.shape_cast %11 : vector<2x8x1x16xf32> to vector<2x8x16xf32>
    %13 = vector.shape_cast %12 : vector<2x8x16xf32> to vector<2x8x1x16xf32>
    %14 = vector.extract_strided_slice %7 {offsets = [0, 0, 0, 0], sizes = [2, 8, 1, 16], strides = [1, 1, 1, 1]} : vector<2x8x4x16xf32> to vector<2x8x1x16xf32>
    %15 = vector.shape_cast %14 : vector<2x8x1x16xf32> to vector<2x8x16xf32>
    %16 = vector.shape_cast %15 : vector<2x8x16xf32> to vector<2x1x8x16xf32>
    %17 = vector.broadcast %13 : vector<2x8x1x16xf32> to vector<2x8x8x16xf32>
    %18 = vector.broadcast %16 : vector<2x1x8x16xf32> to vector<2x8x8x16xf32>
    %19 = arith.mulf %17, %18 : vector<2x8x8x16xf32>
    %20 = vector.extract_strided_slice %4 {offsets = [0, 0, 1, 0], sizes = [2, 8, 1, 16], strides = [1, 1, 1, 1]} : vector<2x8x4x16xf32> to vector<2x8x1x16xf32>
    %21 = vector.shape_cast %20 : vector<2x8x1x16xf32> to vector<2x8x16xf32>
    %22 = vector.shape_cast %21 : vector<2x8x16xf32> to vector<2x8x1x16xf32>
    %23 = vector.extract_strided_slice %7 {offsets = [0, 0, 1, 0], sizes = [2, 8, 1, 16], strides = [1, 1, 1, 1]} : vector<2x8x4x16xf32> to vector<2x8x1x16xf32>
    %24 = vector.shape_cast %23 : vector<2x8x1x16xf32> to vector<2x8x16xf32>
    %25 = vector.shape_cast %24 : vector<2x8x16xf32> to vector<2x1x8x16xf32>
    %26 = vector.broadcast %22 : vector<2x8x1x16xf32> to vector<2x8x8x16xf32>
    %27 = vector.broadcast %25 : vector<2x1x8x16xf32> to vector<2x8x8x16xf32>
    %28 = arith.mulf %26, %27 : vector<2x8x8x16xf32>
    %29 = arith.addf %19, %28 : vector<2x8x8x16xf32>
    %30 = vector.extract_strided_slice %4 {offsets = [0, 0, 2, 0], sizes = [2, 8, 1, 16], strides = [1, 1, 1, 1]} : vector<2x8x4x16xf32> to vector<2x8x1x16xf32>
    %31 = vector.shape_cast %30 : vector<2x8x1x16xf32> to vector<2x8x16xf32>
    %32 = vector.shape_cast %31 : vector<2x8x16xf32> to vector<2x8x1x16xf32>
    %33 = vector.extract_strided_slice %7 {offsets = [0, 0, 2, 0], sizes = [2, 8, 1, 16], strides = [1, 1, 1, 1]} : vector<2x8x4x16xf32> to vector<2x8x1x16xf32>
    %34 = vector.shape_cast %33 : vector<2x8x1x16xf32> to vector<2x8x16xf32>
    %35 = vector.shape_cast %34 : vector<2x8x16xf32> to vector<2x1x8x16xf32>
    %36 = vector.broadcast %32 : vector<2x8x1x16xf32> to vector<2x8x8x16xf32>
    %37 = vector.broadcast %35 : vector<2x1x8x16xf32> to vector<2x8x8x16xf32>
    %38 = arith.mulf %36, %37 : vector<2x8x8x16xf32>
    %39 = arith.addf %29, %38 : vector<2x8x8x16xf32>
    %40 = vector.extract_strided_slice %4 {offsets = [0, 0, 3, 0], sizes = [2, 8, 1, 16], strides = [1, 1, 1, 1]} : vector<2x8x4x16xf32> to vector<2x8x1x16xf32>
    %41 = vector.shape_cast %40 : vector<2x8x1x16xf32> to vector<2x8x16xf32>
    %42 = vector.shape_cast %41 : vector<2x8x16xf32> to vector<2x8x1x16xf32>
    %43 = vector.extract_strided_slice %7 {offsets = [0, 0, 3, 0], sizes = [2, 8, 1, 16], strides = [1, 1, 1, 1]} : vector<2x8x4x16xf32> to vector<2x8x1x16xf32>
    %44 = vector.shape_cast %43 : vector<2x8x1x16xf32> to vector<2x8x16xf32>
    %45 = vector.shape_cast %44 : vector<2x8x16xf32> to vector<2x1x8x16xf32>
    %46 = vector.broadcast %42 : vector<2x8x1x16xf32> to vector<2x8x8x16xf32>
    %47 = vector.broadcast %45 : vector<2x1x8x16xf32> to vector<2x8x8x16xf32>
    %48 = arith.mulf %46, %47 : vector<2x8x8x16xf32>
    %49 = arith.addf %39, %48 : vector<2x8x8x16xf32>
    %cst = arith.constant 5.000000e-01 : f32
    %50 = vector.broadcast %cst : f32 to vector<2x8x8x16xf32>
    %51 = arith.mulf %49, %50 : vector<2x8x8x16xf32>
    %cst_15 = arith.constant dense<0xFF800000> : vector<2x8x16xf32>
    %52 = vector.multi_reduction <maximumf>, %51, %cst_15 [2] : vector<2x8x8x16xf32> to vector<2x8x16xf32>
    %53 = vector.shape_cast %52 : vector<2x8x16xf32> to vector<2x8x1x16xf32>
    %54 = vector.broadcast %53 : vector<2x8x1x16xf32> to vector<2x8x8x16xf32>
    %55 = arith.subf %51, %54 : vector<2x8x8x16xf32>
    %56 = math.exp %55 : vector<2x8x8x16xf32>
    %cst_16 = arith.constant dense<0.000000e+00> : vector<2x8x16xf32>
    %57 = vector.multi_reduction <add>, %56, %cst_16 [2] : vector<2x8x8x16xf32> to vector<2x8x16xf32>
    %58 = vector.shape_cast %57 : vector<2x8x16xf32> to vector<2x8x1x16xf32>
    %59 = tpu.reciprocal %58 {approx = true} : vector<2x8x1x16xf32> -> vector<2x8x1x16xf32>
    %60 = vector.broadcast %59 : vector<2x8x1x16xf32> to vector<2x8x8x16xf32>
    %61 = arith.mulf %56, %60 : vector<2x8x8x16xf32>
    %62 = vector.broadcast %3 : vector<1x8x1x16xf32> to vector<2x8x4x16xf32>
    %63 = arith.mulf %10, %62 : vector<2x8x4x16xf32>
    %64 = vector.extract_strided_slice %61 {offsets = [0, 0, 0, 0], sizes = [2, 8, 1, 16], strides = [1, 1, 1, 1]} : vector<2x8x8x16xf32> to vector<2x8x1x16xf32>
    %65 = vector.shape_cast %64 : vector<2x8x1x16xf32> to vector<2x8x16xf32>
    %66 = vector.shape_cast %65 : vector<2x8x16xf32> to vector<2x8x1x16xf32>
    %67 = vector.extract_strided_slice %63 {offsets = [0, 0, 0, 0], sizes = [2, 1, 4, 16], strides = [1, 1, 1, 1]} : vector<2x8x4x16xf32> to vector<2x1x4x16xf32>
    %68 = vector.shape_cast %67 : vector<2x1x4x16xf32> to vector<2x4x16xf32>
    %69 = vector.shape_cast %68 : vector<2x4x16xf32> to vector<2x1x4x16xf32>
    %70 = vector.broadcast %66 : vector<2x8x1x16xf32> to vector<2x8x4x16xf32>
    %71 = vector.broadcast %69 : vector<2x1x4x16xf32> to vector<2x8x4x16xf32>
    %72 = arith.mulf %70, %71 : vector<2x8x4x16xf32>
    %73 = vector.extract_strided_slice %61 {offsets = [0, 0, 1, 0], sizes = [2, 8, 1, 16], strides = [1, 1, 1, 1]} : vector<2x8x8x16xf32> to vector<2x8x1x16xf32>
    %74 = vector.shape_cast %73 : vector<2x8x1x16xf32> to vector<2x8x16xf32>
    %75 = vector.shape_cast %74 : vector<2x8x16xf32> to vector<2x8x1x16xf32>
    %76 = vector.extract_strided_slice %63 {offsets = [0, 1, 0, 0], sizes = [2, 1, 4, 16], strides = [1, 1, 1, 1]} : vector<2x8x4x16xf32> to vector<2x1x4x16xf32>
    %77 = vector.shape_cast %76 : vector<2x1x4x16xf32> to vector<2x4x16xf32>
    %78 = vector.shape_cast %77 : vector<2x4x16xf32> to vector<2x1x4x16xf32>
    %79 = vector.broadcast %75 : vector<2x8x1x16xf32> to vector<2x8x4x16xf32>
    %80 = vector.broadcast %78 : vector<2x1x4x16xf32> to vector<2x8x4x16xf32>
    %81 = arith.mulf %79, %80 : vector<2x8x4x16xf32>
    %82 = arith.addf %72, %81 : vector<2x8x4x16xf32>
    %83 = vector.extract_strided_slice %61 {offsets = [0, 0, 2, 0], sizes = [2, 8, 1, 16], strides = [1, 1, 1, 1]} : vector<2x8x8x16xf32> to vector<2x8x1x16xf32>
    %84 = vector.shape_cast %83 : vector<2x8x1x16xf32> to vector<2x8x16xf32>
    %85 = vector.shape_cast %84 : vector<2x8x16xf32> to vector<2x8x1x16xf32>
    %86 = vector.extract_strided_slice %63 {offsets = [0, 2, 0, 0], sizes = [2, 1, 4, 16], strides = [1, 1, 1, 1]} : vector<2x8x4x16xf32> to vector<2x1x4x16xf32>
    %87 = vector.shape_cast %86 : vector<2x1x4x16xf32> to vector<2x4x16xf32>
    %88 = vector.shape_cast %87 : vector<2x4x16xf32> to vector<2x1x4x16xf32>
    %89 = vector.broadcast %85 : vector<2x8x1x16xf32> to vector<2x8x4x16xf32>
    %90 = vector.broadcast %88 : vector<2x1x4x16xf32> to vector<2x8x4x16xf32>
    %91 = arith.mulf %89, %90 : vector<2x8x4x16xf32>
    %92 = arith.addf %82, %91 : vector<2x8x4x16xf32>
    %93 = vector.extract_strided_slice %61 {offsets = [0, 0, 3, 0], sizes = [2, 8, 1, 16], strides = [1, 1, 1, 1]} : vector<2x8x8x16xf32> to vector<2x8x1x16xf32>
    %94 = vector.shape_cast %93 : vector<2x8x1x16xf32> to vector<2x8x16xf32>
    %95 = vector.shape_cast %94 : vector<2x8x16xf32> to vector<2x8x1x16xf32>
    %96 = vector.extract_strided_slice %63 {offsets = [0, 3, 0, 0], sizes = [2, 1, 4, 16], strides = [1, 1, 1, 1]} : vector<2x8x4x16xf32> to vector<2x1x4x16xf32>
    %97 = vector.shape_cast %96 : vector<2x1x4x16xf32> to vector<2x4x16xf32>
    %98 = vector.shape_cast %97 : vector<2x4x16xf32> to vector<2x1x4x16xf32>
    %99 = vector.broadcast %95 : vector<2x8x1x16xf32> to vector<2x8x4x16xf32>
    %100 = vector.broadcast %98 : vector<2x1x4x16xf32> to vector<2x8x4x16xf32>
    %101 = arith.mulf %99, %100 : vector<2x8x4x16xf32>
    %102 = arith.addf %92, %101 : vector<2x8x4x16xf32>
    %103 = vector.extract_strided_slice %61 {offsets = [0, 0, 4, 0], sizes = [2, 8, 1, 16], strides = [1, 1, 1, 1]} : vector<2x8x8x16xf32> to vector<2x8x1x16xf32>
    %104 = vector.shape_cast %103 : vector<2x8x1x16xf32> to vector<2x8x16xf32>
    %105 = vector.shape_cast %104 : vector<2x8x16xf32> to vector<2x8x1x16xf32>
    %106 = vector.extract_strided_slice %63 {offsets = [0, 4, 0, 0], sizes = [2, 1, 4, 16], strides = [1, 1, 1, 1]} : vector<2x8x4x16xf32> to vector<2x1x4x16xf32>
    %107 = vector.shape_cast %106 : vector<2x1x4x16xf32> to vector<2x4x16xf32>
    %108 = vector.shape_cast %107 : vector<2x4x16xf32> to vector<2x1x4x16xf32>
    %109 = vector.broadcast %105 : vector<2x8x1x16xf32> to vector<2x8x4x16xf32>
    %110 = vector.broadcast %108 : vector<2x1x4x16xf32> to vector<2x8x4x16xf32>
    %111 = arith.mulf %109, %110 : vector<2x8x4x16xf32>
    %112 = arith.addf %102, %111 : vector<2x8x4x16xf32>
    %113 = vector.extract_strided_slice %61 {offsets = [0, 0, 5, 0], sizes = [2, 8, 1, 16], strides = [1, 1, 1, 1]} : vector<2x8x8x16xf32> to vector<2x8x1x16xf32>
    %114 = vector.shape_cast %113 : vector<2x8x1x16xf32> to vector<2x8x16xf32>
    %115 = vector.shape_cast %114 : vector<2x8x16xf32> to vector<2x8x1x16xf32>
    %116 = vector.extract_strided_slice %63 {offsets = [0, 5, 0, 0], sizes = [2, 1, 4, 16], strides = [1, 1, 1, 1]} : vector<2x8x4x16xf32> to vector<2x1x4x16xf32>
    %117 = vector.shape_cast %116 : vector<2x1x4x16xf32> to vector<2x4x16xf32>
    %118 = vector.shape_cast %117 : vector<2x4x16xf32> to vector<2x1x4x16xf32>
    %119 = vector.broadcast %115 : vector<2x8x1x16xf32> to vector<2x8x4x16xf32>
    %120 = vector.broadcast %118 : vector<2x1x4x16xf32> to vector<2x8x4x16xf32>
    %121 = arith.mulf %119, %120 : vector<2x8x4x16xf32>
    %122 = arith.addf %112, %121 : vector<2x8x4x16xf32>
    %123 = vector.extract_strided_slice %61 {offsets = [0, 0, 6, 0], sizes = [2, 8, 1, 16], strides = [1, 1, 1, 1]} : vector<2x8x8x16xf32> to vector<2x8x1x16xf32>
    %124 = vector.shape_cast %123 : vector<2x8x1x16xf32> to vector<2x8x16xf32>
    %125 = vector.shape_cast %124 : vector<2x8x16xf32> to vector<2x8x1x16xf32>
    %126 = vector.extract_strided_slice %63 {offsets = [0, 6, 0, 0], sizes = [2, 1, 4, 16], strides = [1, 1, 1, 1]} : vector<2x8x4x16xf32> to vector<2x1x4x16xf32>
    %127 = vector.shape_cast %126 : vector<2x1x4x16xf32> to vector<2x4x16xf32>
    %128 = vector.shape_cast %127 : vector<2x4x16xf32> to vector<2x1x4x16xf32>
    %129 = vector.broadcast %125 : vector<2x8x1x16xf32> to vector<2x8x4x16xf32>
    %130 = vector.broadcast %128 : vector<2x1x4x16xf32> to vector<2x8x4x16xf32>
    %131 = arith.mulf %129, %130 : vector<2x8x4x16xf32>
    %132 = arith.addf %122, %131 : vector<2x8x4x16xf32>
    %133 = vector.extract_strided_slice %61 {offsets = [0, 0, 7, 0], sizes = [2, 8, 1, 16], strides = [1, 1, 1, 1]} : vector<2x8x8x16xf32> to vector<2x8x1x16xf32>
    %134 = vector.shape_cast %133 : vector<2x8x1x16xf32> to vector<2x8x16xf32>
    %135 = vector.shape_cast %134 : vector<2x8x16xf32> to vector<2x8x1x16xf32>
    %136 = vector.extract_strided_slice %63 {offsets = [0, 7, 0, 0], sizes = [2, 1, 4, 16], strides = [1, 1, 1, 1]} : vector<2x8x4x16xf32> to vector<2x1x4x16xf32>
    %137 = vector.shape_cast %136 : vector<2x1x4x16xf32> to vector<2x4x16xf32>
    %138 = vector.shape_cast %137 : vector<2x4x16xf32> to vector<2x1x4x16xf32>
    %139 = vector.broadcast %135 : vector<2x8x1x16xf32> to vector<2x8x4x16xf32>
    %140 = vector.broadcast %138 : vector<2x1x4x16xf32> to vector<2x8x4x16xf32>
    %141 = arith.mulf %139, %140 : vector<2x8x4x16xf32>
    %142 = arith.addf %132, %141 : vector<2x8x4x16xf32>
    %143 = vector.broadcast %3 : vector<1x8x1x16xf32> to vector<2x8x4x16xf32>
    %144 = arith.mulf %142, %143 : vector<2x8x4x16xf32>
    %145 = vector.broadcast %1 : vector<1x8x1x16xf32> to vector<2x8x4x16xf32>
    %146 = arith.mulf %144, %145 : vector<2x8x4x16xf32>
    %c0_17 = arith.constant 0 : index
    %c0_18 = arith.constant 0 : index
    %c0_19 = arith.constant 0 : index
    %c0_20 = arith.constant 0 : index
    %147 = vector.load %arg6[%c0_17, %c0_18, %c0_19, %c0_20] : memref<2x8x4x16xf32, #tpu.memory_space<vmem>>, vector<2x8x4x16xf32>
    tpu.vector_store %arg6[%c0_17, %c0_18, %c0_19, %c0_20], %146 {strides = array<i32>} : memref<2x8x4x16xf32, #tpu.memory_space<vmem>>, vector<2x8x4x16xf32>,
    return
  }
  func.func @transform_0(%arg0: i32) -> (i32, i32, i32, i32) {
    %c0_i32 = arith.constant 0 : i32
    %c0_i32_0 = arith.constant 0 : i32
    %c0_i32_1 = arith.constant 0 : i32
    %c0_i32_2 = arith.constant 0 : i32
    return %c0_i32, %c0_i32_0, %c0_i32_1, %arg0 : i32, i32, i32, i32
  }
  func.func @transform_1(%arg0: i32) -> (i32, i32, i32, i32) {
    %c0_i32 = arith.constant 0 : i32
    %c0_i32_0 = arith.constant 0 : i32
    %c0_i32_1 = arith.constant 0 : i32
    %c0_i32_2 = arith.constant 0 : i32
    return %c0_i32, %c0_i32_0, %c0_i32_1, %arg0 : i32, i32, i32, i32
  }
  func.func @transform_2(%arg0: i32) -> (i32, i32, i32, i32) {
    %c0_i32 = arith.constant 0 : i32
    %c0_i32_0 = arith.constant 0 : i32
    %c0_i32_1 = arith.constant 0 : i32
    %c0_i32_2 = arith.constant 0 : i32
    return %c0_i32, %c0_i32_0, %c0_i32_1, %arg0 : i32, i32, i32, i32
  }
  func.func @transform_3(%arg0: i32) -> (i32, i32) {
    %c0_i32 = arith.constant 0 : i32
    %c0_i32_0 = arith.constant 0 : i32
    return %c0_i32, %arg0 : i32, i32
  }
  func.func @transform_4(%arg0: i32) -> (i32, i32) {
    %c0_i32 = arith.constant 0 : i32
    %c0_i32_0 = arith.constant 0 : i32
    return %c0_i32, %arg0 : i32, i32
  }
  func.func @transform_5(%arg0: i32) -> (i32, i32, i32, i32) {
    %c0_i32 = arith.constant 0 : i32
    %c0_i32_0 = arith.constant 0 : i32
    %c0_i32_1 = arith.constant 0 : i32
    %c0_i32_2 = arith.constant 0 : i32
    return %c0_i32, %c0_i32_0, %c0_i32_1, %arg0 : i32, i32, i32, i32
  }
}

module attributes {stable_mosaic.version = 11 : i64} {
  func.func @_scatter_add_kernel(%arg0: i32, %arg1: memref<128x1xi32, #tpu.memory_space<vmem>>, %arg2: memref<8x128xf32, #tpu.memory_space<vmem>>, %arg3: memref<8x256xf32, #tpu.memory_space<vmem>>, %arg4: memref<8x256xf32, #tpu.memory_space<vmem>>) attributes {dimension_semantics = [#tpu.dimension_semantics<parallel>], iteration_bounds = array<i64: 1>, scalar_prefetch = 0 : i64, scratch_operands = 0 : i64, tpu.core_type = #tpu.core_type<tc>, window_params = [{pipeline_mode = #tpu.pipeline_mode<synchronous>, transform_indices = @transform_0, window_bounds = array<i64: 128, 1>}, {pipeline_mode = #tpu.pipeline_mode<synchronous>, transform_indices = @transform_1, window_bounds = array<i64: 8, 128>}, {transform_indices = @transform_2, window_bounds = array<i64: 8, 256>}, {transform_indices = @transform_3, window_bounds = array<i64: 8, 256>}]} {
    %c256_i32 = arith.constant 256 : i32
    %0 = arith.muli %arg0, %c256_i32 : i32
    %1 = tpu.iota {dimensions = array<i32: 1>} : vector<128x256xi32>
    %2 = vector.broadcast %0 : i32 to vector<128x256xi32>
    %3 = arith.addi %1, %2 : vector<128x256xi32>
    %c0 = arith.constant 0 : index
    %c0_0 = arith.constant 0 : index
    %4 = vector.load %arg1[%c0, %c0_0] : memref<128x1xi32, #tpu.memory_space<vmem>>, vector<128x1xi32>
    %5 = vector.broadcast %4 : vector<128x1xi32> to vector<128x256xi32>
    %6 = arith.cmpi eq, %5, %3 : vector<128x256xi32>
    %7 = arith.extui %6 : vector<128x256xi1> to vector<128x256xi32>
    %8 = arith.sitofp %7 : vector<128x256xi32> to vector<128x256xf32>
    %9 = arith.truncf %8 : vector<128x256xf32> to vector<128x256xbf16>
    %c0_1 = arith.constant 0 : index
    %c0_2 = arith.constant 0 : index
    %10 = vector.load %arg2[%c0_1, %c0_2] : memref<8x128xf32, #tpu.memory_space<vmem>>, vector<8x128xf32>
    %11 = arith.truncf %10 : vector<8x128xf32> to vector<8x128xbf16>
    %cst = arith.constant dense<0.000000e+00> : vector<8x256xf32>
    %12 = tpu.matmul %11, %9, %cst {dimension_numbers = #tpu.dot_dimension_numbers<[1], [0], [0], [1], [0, 0, 1, 1], [], []>} : vector<8x128xbf16>, vector<128x256xbf16>, vector<8x256xf32> -> vector<8x256xf32>
    %c0_3 = arith.constant 0 : index
    %c0_4 = arith.constant 0 : index
    %13 = vector.load %arg3[%c0_3, %c0_4] : memref<8x256xf32, #tpu.memory_space<vmem>>, vector<8x256xf32>
    %14 = arith.addf %13, %12 : vector<8x256xf32>
    %c0_5 = arith.constant 0 : index
    %c0_6 = arith.constant 0 : index
    %15 = vector.load %arg4[%c0_5, %c0_6] : memref<8x256xf32, #tpu.memory_space<vmem>>, vector<8x256xf32>
    tpu.vector_store %arg4[%c0_5, %c0_6], %14 {strides = array<i32>} : memref<8x256xf32, #tpu.memory_space<vmem>>, vector<8x256xf32>,
    return
  }
  func.func @transform_0(%arg0: i32) -> (i32, i32) {
    %c0_i32 = arith.constant 0 : i32
    %c0_i32_0 = arith.constant 0 : i32
    %c0_i32_1 = arith.constant 0 : i32
    return %c0_i32, %c0_i32_0 : i32, i32
  }
  func.func @transform_1(%arg0: i32) -> (i32, i32) {
    %c0_i32 = arith.constant 0 : i32
    %c0_i32_0 = arith.constant 0 : i32
    %c0_i32_1 = arith.constant 0 : i32
    return %c0_i32, %c0_i32_0 : i32, i32
  }
  func.func @transform_2(%arg0: i32) -> (i32, i32) {
    %c0_i32 = arith.constant 0 : i32
    %c0_i32_0 = arith.constant 0 : i32
    return %c0_i32, %arg0 : i32, i32
  }
  func.func @transform_3(%arg0: i32) -> (i32, i32) {
    %c0_i32 = arith.constant 0 : i32
    %c0_i32_0 = arith.constant 0 : i32
    return %c0_i32, %arg0 : i32, i32
  }
}

</mosaic_0001>

<llo_original>
// kernel: sp_intra_att_v3.3
$region0: #{sp_intra_att_v3.3}
  #allocation0 [shape = 'u32[]', space=smem, size = 0x4, offset = 0x4, fixed_abs, tag = 'smem constant byte address 0x4 - core index']
  #allocation1 [shape = 'u32[144,128]{1,0:T(1,128)}', space=vmem, size = 0x12000, scoped, tag = 'internal scratch']
  %s0 = inlined_call_operand.vmem [shape: f32[8,256], index: 0, kind: input, shape index: {}]
  %s1 = inlined_call_operand.vmem [shape: f32[8,1], index: 1, kind: input, shape index: {}]
  %s2 = inlined_call_operand.vmem [shape: f32[8,1], index: 2, kind: input, shape index: {}]
  %s3 = inlined_call_operand.vmem [shape: bf16[24,8], index: 3, kind: input, shape index: {}]
  %s4 = inlined_call_operand.vmem [shape: f32[8,256], index: 4, kind: output, shape index: {0}]
  %s5 = inlined_call_operand.vmem [shape: f32[8,256], index: 5, kind: output, shape index: {1}]
  %s6 = inlined_call_operand.vmem [shape: f32[8,256], index: 6, kind: output, shape index: {2}]
  %7 = xla_tuple %s4, %s5, %s6
  %s8 = sld [smem:[#allocation0]]
  $region42: #{sp_intra_att_v3.3} parent=0
    _
  %s10 = ssub.s32 1, %s8
  %s11 = scalar_select 0, %s10, %s8
  // Predicated region
  $region2: #{sp_intra_att_v3.3} parent=0 // pred_check
    _
  $region3: #{sp_intra_att_v3.3} parent=0 // pred_check_branch
    %13 = sbr.rel (0) target = $region5
  $region4: #{sp_intra_att_v3.3} parent=0 // pred_region
    _
  $region5: #{sp_intra_att_v3.3} parent=0 // pred_fallthru
    _
  // Predicated region
  $region6: #{sp_intra_att_v3.3} parent=0 // pred_check
    _
  $region7: #{sp_intra_att_v3.3} parent=0 // pred_check_branch
    %15 = sbr.rel (0) target = $region9
  $region8: #{sp_intra_att_v3.3} parent=0 // pred_region
    _
  $region9: #{sp_intra_att_v3.3} parent=0 // pred_fallthru
    _
  // Predicated region
  $region10: #{sp_intra_att_v3.3} parent=0 // pred_check
    _
  $region11: #{sp_intra_att_v3.3} parent=0 // pred_check_branch
    %17 = sbr.rel (0) target = $region13
  $region12: #{sp_intra_att_v3.3} parent=0 // pred_region
    _
  $region13: #{sp_intra_att_v3.3} parent=0 // pred_fallthru
    _
  // Predicated region
  $region14: #{sp_intra_att_v3.3} parent=0 // pred_check
    _
  $region15: #{sp_intra_att_v3.3} parent=0 // pred_check_branch
    %19 = sbr.rel (0) target = $region17
  $region16: #{sp_intra_att_v3.3} parent=0 // pred_region
    _
  $region17: #{sp_intra_att_v3.3} parent=0 // pred_fallthru
    _
  %v21 = vld [vmem:[%s0] sm:$0xff]
  %v22 = vld [vmem:[%s0 + $0x8] sm:$0xff]
  %v23 = vrot.slane %v21, 4
  %v24 = vadd.f32 %v21, %v23
  %v25 = vrot.slane %v24, 2
  %v26 = vadd.f32 %v24, %v25
  %v27 = vrot.slane %v26, 1
  %v28 = vadd.f32 %v26, %v27
  %v29 = vrot.slane %v22, 4
  %v30 = vadd.f32 %v22, %v29
  %v31 = vrot.slane %v30, 2
  %v32 = vadd.f32 %v30, %v31
  %v33 = vrot.slane %v32, 1
  %v34 = vadd.f32 %v32, %v33
  %v35 = vrcp.pop 8.0
  %v36 = vmul.f32 %v28, %v35
  %v37 = vmul.f32 %v34, %v35
  %v38 = vsub.f32 %v21, %v36
  %v39 = vsub.f32 %v22, %v37
  %v40 = vmul.f32 %v38, %v38
  %v41 = vmul.f32 %v39, %v39
  %v42 = vrot.slane %v40, 4
  %v43 = vadd.f32 %v40, %v42
  %v44 = vrot.slane %v43, 2
  %v45 = vadd.f32 %v43, %v44
  %v46 = vrot.slane %v45, 1
  %v47 = vadd.f32 %v45, %v46
  %v48 = vrot.slane %v41, 4
  %v49 = vadd.f32 %v41, %v48
  %v50 = vrot.slane %v49, 2
  %v51 = vadd.f32 %v49, %v50
  %v52 = vrot.slane %v51, 1
  %v53 = vadd.f32 %v51, %v52
  %v54 = vmul.f32 %v47, %v35
  %v55 = vmul.f32 %v53, %v35
  %v56 = vadd.f32 %v54, 1e-05
  %v57 = vadd.f32 %v55, 1e-05
  %v58 = vrsqrt.pop %v56
  %v59 = vrsqrt.pop %v57
  %v60 = vmul.f32 %v38, %v58
  %v61 = vmul.f32 %v39, %v59
  %v62 = vld [vmem:[%s1] sm:$0xff]
  %64 = vset.pattern.permute.xlu0 0
  %65 = vperm.xlu0 %64, %v62
  %v66 = vpop.permute.xlu0 %65
  %v68 = vmul.f32 %v60, %v66
  %v69 = vmul.f32 %v61, %v66
  %v70 = vld [vmem:[%s2] sm:$0xff]
  %72 = vset.pattern.permute.xlu0 0
  %73 = vperm.xlu0 %72, %v70
  %v74 = vpop.permute.xlu0 %73
  %v76 = vadd.f32 %v68, %v74
  %v77 = vadd.f32 %v69, %v74
  %v78 = vld [vmem:[%s3] sm:$0xf]
  %v79 = vld [vmem:[%s3 + $0x4] sm:$0xf]
  %v80 = vld [vmem:[%s3 + $0x8] sm:$0xf]
  %v81 = vpack.c.bf16 %v76, %v76
  %v82 = vpack.c.bf16 %v77, %v77
  %v86 = vunpack.c.l.b16 %v78
  %v87 = vunpack.c.l.b16 %v79
  %v88 = vunpack.c.l.b16 %v80
  %v89 = vpack.c.b16 %v87, %v86
  %v90 = vpack.c.b16 %v88, %v88
  %vm91 = vcmask 64512
  %v93 = vsel %vm91, %v89, 0
  %v96 = vsel %vm91, %v90, 0
  %vm98 = vcmask 1043456
  %v100 = vsel %vm98, %v81, 0
  %v103 = vsel %vm98, %v82, 0
  %105 = vmatprep.subr.bf16.mxu0 0
  %106 = vmatpush1.bf16.msra.mxu0 0
  %107 = vmatprep.subr.bf16.mxu0 0
  %108 = vmatpush1.bf16.msra.mxu0 0
  %109 = vmatprep.subr.bf16.mxu0 0
  %110 = vmatpush1.bf16.msra.mxu0 0
  %111 = vmatprep.subr.bf16.mxu0 0
  %112 = vmatpush1.bf16.msra.mxu0 0
  %113 = vmatprep.subr.bf16.mxu0 0
  %114 = vmatpush1.bf16.msra.mxu0 0
  %115 = vmatprep.subr.bf16.mxu0 0
  %116 = vmatpush1.bf16.msra.mxu0 0
  %117 = vmatprep.subr.bf16.mxu0 0
  %118 = vmatpush1.bf16.msra.mxu0 0
  %119 = vmatprep.subr.bf16.mxu0 %v103
  %120 = vmatpush1.bf16.msra.mxu0 %v100
  %121 = vmatprep.subr.bf16.mxu0 0
  %122 = vmatpush2.bf16.msra.mxu0 0
  %123 = vmatprep.subr.bf16.mxu0 0
  %124 = vmatpush2.bf16.msra.mxu0 0
  %125 = vmatprep.subr.bf16.mxu0 0
  %126 = vmatpush2.bf16.msra.mxu0 0
  %127 = vmatprep.subr.bf16.mxu0 0
  %128 = vmatpush2.bf16.msra.mxu0 0
  %129 = vmatprep.subr.bf16.mxu0 0
  %130 = vmatpush2.bf16.msra.mxu0 0
  %131 = vmatprep.subr.bf16.mxu0 0
  %132 = vmatpush2.bf16.msra.mxu0 0
  %133 = vmatprep.subr.bf16.mxu0 0
  %134 = vmatpush2.bf16.msra.mxu0 0
  %135 = vmatprep.subr.bf16.mxu0 0
  %136 = vmatpush2.bf16.msra.mxu0 0
  %137 = vmatprep.mubr.bf16.mxu0 0
  %138 = vmatmul.mubr.bf16.gmra.mxu0 %v93
  %v139 = vpop.f32.mrf.mxu0
  %v140 = vadd.f32 0.0, %v139
  %v141 = vpop.f32.mrf.mxu0
  %v142 = vadd.f32 0.0, %v141
  %v143 = vpop.f32.mrf.mxu0
  %v144 = vadd.f32 0.0, %v143
  %v145 = vpop.f32.mrf.mxu0
  %v146 = vadd.f32 0.0, %v145
  %147 = vmatprep.mubr.bf16.mxu0 0
  %148 = vmatmul.mubr.bf16.gmra.mxu0 %v96
  %v149 = vpop.f32.mrf.mxu0
  %v150 = vadd.f32 0.0, %v149
  %v151 = vpop.f32.mrf.mxu0
  %v152 = vadd.f32 0.0, %v151
  %v153 = vpop.f32.mrf.mxu0
  %v154 = vpop.f32.mrf.mxu0
  %155 = vdwg.mxu0
  %156 = vst [vmem:[%s4] sm:$0xff] %v140
  %157 = vst [vmem:[%s4 + $0x8] sm:$0xff] %v142
  %158 = vst [vmem:[%s5] sm:$0xff] %v144
  %159 = vst [vmem:[%s5 + $0x8] sm:$0xff] %v146
  %160 = vst [vmem:[%s6] sm:$0xff] %v150
  %161 = vst [vmem:[%s6 + $0x8] sm:$0xff] %v152
  // Predicated region
  $region18: #{sp_intra_att_v3.3} parent=0 // pred_check
    _
  $region19: #{sp_intra_att_v3.3} parent=0 // pred_check_branch
    %163 = sbr.rel (0) target = $region21
  $region20: #{sp_intra_att_v3.3} parent=0 // pred_region
    _
  $region21: #{sp_intra_att_v3.3} parent=0 // pred_fallthru
    _
  // Predicated region
  $region22: #{sp_intra_att_v3.3} parent=0 // pred_check
    _
  $region23: #{sp_intra_att_v3.3} parent=0 // pred_check_branch
    %165 = sbr.rel (0) target = $region25
  $region24: #{sp_intra_att_v3.3} parent=0 // pred_region
    _
  $region25: #{sp_intra_att_v3.3} parent=0 // pred_fallthru
    _
  // Predicated region
  $region26: #{sp_intra_att_v3.3} parent=0 // pred_check
    _
  $region27: #{sp_intra_att_v3.3} parent=0 // pred_check_branch
    %167 = sbr.rel (0) target = $region29
  $region28: #{sp_intra_att_v3.3} parent=0 // pred_region
    _
  $region29: #{sp_intra_att_v3.3} parent=0 // pred_fallthru
    _
  // Predicated region
  $region30: #{sp_intra_att_v3.3} parent=0 // pred_check
    _
  $region31: #{sp_intra_att_v3.3} parent=0 // pred_check_branch
    %169 = sbr.rel (0) target = $region33
  $region32: #{sp_intra_att_v3.3} parent=0 // pred_region
    _
  $region33: #{sp_intra_att_v3.3} parent=0 // pred_fallthru
    _
  // Predicated region
  $region34: #{sp_intra_att_v3.3} parent=0 // pred_check
    _
  $region35: #{sp_intra_att_v3.3} parent=0 // pred_check_branch
    %171 = sbr.rel (0) target = $region37
  $region36: #{sp_intra_att_v3.3} parent=0 // pred_region
    _
  $region37: #{sp_intra_att_v3.3} parent=0 // pred_fallthru
    _
  // Predicated region
  $region38: #{sp_intra_att_v3.3} parent=0 // pred_check
    _
  $region39: #{sp_intra_att_v3.3} parent=0 // pred_check_branch
    %173 = sbr.rel (0) target = $region41
  $region40: #{sp_intra_att_v3.3} parent=0 // pred_region
    _
  $region41: #{sp_intra_att_v3.3} parent=0 // pred_fallthru
    _

// kernel: sp_intra_att_v3.5
$region0: #{sp_intra_att_v3.5}
  #allocation0 [shape = 'u32[]', space=smem, size = 0x4, offset = 0x4, fixed_abs, tag = 'smem constant byte address 0x4 - core index']
  #allocation1 [shape = 'u32[144,128]{1,0:T(1,128)}', space=vmem, size = 0x12000, scoped, tag = 'internal scratch']
  %s0 = inlined_call_operand.vmem [shape: s32[128,1], index: 0, kind: input, shape index: {}]
  %s1 = inlined_call_operand.vmem [shape: f32[8,128], index: 1, kind: input, shape index: {}]
  %s2 = inlined_call_operand.vmem [shape: f32[8,256], index: 2, kind: input, shape index: {}, may-alias: {2,3}]
  %s3 = inlined_call_operand.vmem [shape: f32[8,256], index: 3, kind: output, shape index: {}, may-alias: {2,3}]
  %s4 = sld [smem:[#allocation0]]
  $region22: #{sp_intra_att_v3.5} parent=0
    _
  %s6 = ssub.s32 1, %s4
  %s7 = scalar_select 0, %s6, %s4
  // Predicated region
  $region2: #{sp_intra_att_v3.5} parent=0 // pred_check
    _
  $region3: #{sp_intra_att_v3.5} parent=0 // pred_check_branch
    %9 = sbr.rel (0) target = $region5
  $region4: #{sp_intra_att_v3.5} parent=0 // pred_region
    _
  $region5: #{sp_intra_att_v3.5} parent=0 // pred_fallthru
    _
  // Predicated region
  $region6: #{sp_intra_att_v3.5} parent=0 // pred_check
    _
  $region7: #{sp_intra_att_v3.5} parent=0 // pred_check_branch
    %11 = sbr.rel (0) target = $region9
  $region8: #{sp_intra_att_v3.5} parent=0 // pred_region
    _
  $region9: #{sp_intra_att_v3.5} parent=0 // pred_fallthru
    _
  // Predicated region
  $region10: #{sp_intra_att_v3.5} parent=0 // pred_check
    _
  $region11: #{sp_intra_att_v3.5} parent=0 // pred_check_branch
    %13 = sbr.rel (0) target = $region13
  $region12: #{sp_intra_att_v3.5} parent=0 // pred_region
    _
  $region13: #{sp_intra_att_v3.5} parent=0 // pred_fallthru
    _
  %s15 = smul.u32 0, 256
  %v16 = vlaneseq
  %v17 = vand.u32 %v16, 127
  %v18 = vadd.s32 %v17, 128
  %v19 = vstv %s15
  %v20 = vadd.s32 %v17, %v19
  %v21 = vadd.s32 %v18, %v19
  %v22 = vld [vmem:[%s0] sm:$0xff]
  %v23 = vld [vmem:[%s0 + $0x8] sm:$0xff]
  %v24 = vld [vmem:[%s0 + $0x10] sm:$0xff]
  %v25 = vld [vmem:[%s0 + $0x18] sm:$0xff]
  %v26 = vld [vmem:[%s0 + $0x20] sm:$0xff]
  %v27 = vld [vmem:[%s0 + $0x28] sm:$0xff]
  %v28 = vld [vmem:[%s0 + $0x30] sm:$0xff]
  %v29 = vld [vmem:[%s0 + $0x38] sm:$0xff]
  %v30 = vld [vmem:[%s0 + $0x40] sm:$0xff]
  %v31 = vld [vmem:[%s0 + $0x48] sm:$0xff]
  %v32 = vld [vmem:[%s0 + $0x50] sm:$0xff]
  %v33 = vld [vmem:[%s0 + $0x58] sm:$0xff]
  %v34 = vld [vmem:[%s0 + $0x60] sm:$0xff]
  %v35 = vld [vmem:[%s0 + $0x68] sm:$0xff]
  %v36 = vld [vmem:[%s0 + $0x70] sm:$0xff]
  %v37 = vld [vmem:[%s0 + $0x78] sm:$0xff]
  %38 = vset.pattern.permute.xlu0 0
  %39 = vperm.xlu0 %38, %v22
  %v40 = vpop.permute.xlu0 %39
  %41 = vset.pattern.permute.xlu0 0
  %42 = vperm.xlu0 %41, %v23
  %v43 = vpop.permute.xlu0 %42
  %44 = vset.pattern.permute.xlu0 0
  %45 = vperm.xlu0 %44, %v24
  %v46 = vpop.permute.xlu0 %45
  %47 = vset.pattern.permute.xlu0 0
  %48 = vperm.xlu0 %47, %v25
  %v49 = vpop.permute.xlu0 %48
  %50 = vset.pattern.permute.xlu0 0
  %51 = vperm.xlu0 %50, %v26
  %v52 = vpop.permute.xlu0 %51
  %53 = vset.pattern.permute.xlu0 0
  %54 = vperm.xlu0 %53, %v27
  %v55 = vpop.permute.xlu0 %54
  %56 = vset.pattern.permute.xlu0 0
  %57 = vperm.xlu0 %56, %v28
  %v58 = vpop.permute.xlu0 %57
  %59 = vset.pattern.permute.xlu0 0
  %60 = vperm.xlu0 %59, %v29
  %v61 = vpop.permute.xlu0 %60
  %62 = vset.pattern.permute.xlu0 0
  %63 = vperm.xlu0 %62, %v30
  %v64 = vpop.permute.xlu0 %63
  %65 = vset.pattern.permute.xlu0 0
  %66 = vperm.xlu0 %65, %v31
  %v67 = vpop.permute.xlu0 %66
  %68 = vset.pattern.permute.xlu0 0
  %69 = vperm.xlu0 %68, %v32
  %v70 = vpop.permute.xlu0 %69
  %71 = vset.pattern.permute.xlu0 0
  %72 = vperm.xlu0 %71, %v33
  %v73 = vpop.permute.xlu0 %72
  %74 = vset.pattern.permute.xlu0 0
  %75 = vperm.xlu0 %74, %v34
  %v76 = vpop.permute.xlu0 %75
  %77 = vset.pattern.permute.xlu0 0
  %78 = vperm.xlu0 %77, %v35
  %v79 = vpop.permute.xlu0 %78
  %80 = vset.pattern.permute.xlu0 0
  %81 = vperm.xlu0 %80, %v36
  %v82 = vpop.permute.xlu0 %81
  %83 = vset.pattern.permute.xlu0 0
  %84 = vperm.xlu0 %83, %v37
  %v85 = vpop.permute.xlu0 %84
  %vm86 = vcmp.eq.s32.totalorder %v40, %v20
  %vm87 = vcmp.eq.s32.totalorder %v40, %v21
  %vm88 = vcmp.eq.s32.totalorder %v43, %v20
  %vm89 = vcmp.eq.s32.totalorder %v43, %v21
  %vm90 = vcmp.eq.s32.totalorder %v46, %v20
  %vm91 = vcmp.eq.s32.totalorder %v46, %v21
  %vm92 = vcmp.eq.s32.totalorder %v49, %v20
  %vm93 = vcmp.eq.s32.totalorder %v49, %v21
  %vm94 = vcmp.eq.s32.totalorder %v52, %v20
  %vm95 = vcmp.eq.s32.totalorder %v52, %v21
  %vm96 = vcmp.eq.s32.totalorder %v55, %v20
  %vm97 = vcmp.eq.s32.totalorder %v55, %v21
  %vm98 = vcmp.eq.s32.totalorder %v58, %v20
  %vm99 = vcmp.eq.s32.totalorder %v58, %v21
  %vm100 = vcmp.eq.s32.totalorder %v61, %v20
  %vm101 = vcmp.eq.s32.totalorder %v61, %v21
  %vm102 = vcmp.eq.s32.totalorder %v64, %v20
  %vm103 = vcmp.eq.s32.totalorder %v64, %v21
  %vm104 = vcmp.eq.s32.totalorder %v67, %v20
  %vm105 = vcmp.eq.s32.totalorder %v67, %v21
  %vm106 = vcmp.eq.s32.totalorder %v70, %v20
  %vm107 = vcmp.eq.s32.totalorder %v70, %v21
  %vm108 = vcmp.eq.s32.totalorder %v73, %v20
  %vm109 = vcmp.eq.s32.totalorder %v73, %v21
  %vm110 = vcmp.eq.s32.totalorder %v76, %v20
  %vm111 = vcmp.eq.s32.totalorder %v76, %v21
  %vm112 = vcmp.eq.s32.totalorder %v79, %v20
  %vm113 = vcmp.eq.s32.totalorder %v79, %v21
  %vm114 = vcmp.eq.s32.totalorder %v82, %v20
  %vm115 = vcmp.eq.s32.totalorder %v82, %v21
  %vm116 = vcmp.eq.s32.totalorder %v85, %v20
  %vm117 = vcmp.eq.s32.totalorder %v85, %v21
  %v118 = vsel %vm86, 1, 0
  %v119 = vsel %vm87, 1, 0
  %v120 = vsel %vm88, 1, 0
  %v121 = vsel %vm89, 1, 0
  %v122 = vsel %vm90, 1, 0
  %v123 = vsel %vm91, 1, 0
  %v124 = vsel %vm92, 1, 0
  %v125 = vsel %vm93, 1, 0
  %v126 = vsel %vm94, 1, 0
  %v127 = vsel %vm95, 1, 0
  %v128 = vsel %vm96, 1, 0
  %v129 = vsel %vm97, 1, 0
  %v130 = vsel %vm98, 1, 0
  %v131 = vsel %vm99, 1, 0
  %v132 = vsel %vm100, 1, 0
  %v133 = vsel %vm101, 1, 0
  %v134 = vsel %vm102, 1, 0
  %v135 = vsel %vm103, 1, 0
  %v136 = vsel %vm104, 1, 0
  %v137 = vsel %vm105, 1, 0
  %v138 = vsel %vm106, 1, 0
  %v139 = vsel %vm107, 1, 0
  %v140 = vsel %vm108, 1, 0
  %v141 = vsel %vm109, 1, 0
  %v142 = vsel %vm110, 1, 0
  %v143 = vsel %vm111, 1, 0
  %v144 = vsel %vm112, 1, 0
  %v145 = vsel %vm113, 1, 0
  %v146 = vsel %vm114, 1, 0
  %v147 = vsel %vm115, 1, 0
  %v148 = vsel %vm116, 1, 0
  %v149 = vsel %vm117, 1, 0
  %v150 = vcvt.s32.f32 %v118
  %v151 = vcvt.s32.f32 %v119
  %v152 = vcvt.s32.f32 %v120
  %v153 = vcvt.s32.f32 %v121
  %v154 = vcvt.s32.f32 %v122
  %v155 = vcvt.s32.f32 %v123
  %v156 = vcvt.s32.f32 %v124
  %v157 = vcvt.s32.f32 %v125
  %v158 = vcvt.s32.f32 %v126
  %v159 = vcvt.s32.f32 %v127
  %v160 = vcvt.s32.f32 %v128
  %v161 = vcvt.s32.f32 %v129
  %v162 = vcvt.s32.f32 %v130
  %v163 = vcvt.s32.f32 %v131
  %v164 = vcvt.s32.f32 %v132
  %v165 = vcvt.s32.f32 %v133
  %v166 = vcvt.s32.f32 %v134
  %v167 = vcvt.s32.f32 %v135
  %v168 = vcvt.s32.f32 %v136
  %v169 = vcvt.s32.f32 %v137
  %v170 = vcvt.s32.f32 %v138
  %v171 = vcvt.s32.f32 %v139
  %v172 = vcvt.s32.f32 %v140
  %v173 = vcvt.s32.f32 %v141
  %v174 = vcvt.s32.f32 %v142
  %v175 = vcvt.s32.f32 %v143
  %v176 = vcvt.s32.f32 %v144
  %v177 = vcvt.s32.f32 %v145
  %v178 = vcvt.s32.f32 %v146
  %v179 = vcvt.s32.f32 %v147
  %v180 = vcvt.s32.f32 %v148
  %v181 = vcvt.s32.f32 %v149
  %v182 = vpack.c.bf16 %v152, %v150
  %v183 = vpack.c.bf16 %v153, %v151
  %v184 = vpack.c.bf16 %v156, %v154
  %v185 = vpack.c.bf16 %v157, %v155
  %v186 = vpack.c.bf16 %v160, %v158
  %v187 = vpack.c.bf16 %v161, %v159
  %v188 = vpack.c.bf16 %v164, %v162
  %v189 = vpack.c.bf16 %v165, %v163
  %v190 = vpack.c.bf16 %v168, %v166
  %v191 = vpack.c.bf16 %v169, %v167
  %v192 = vpack.c.bf16 %v172, %v170
  %v193 = vpack.c.bf16 %v173, %v171
  %v194 = vpack.c.bf16 %v176, %v174
  %v195 = vpack.c.bf16 %v177, %v175
  %v196 = vpack.c.bf16 %v180, %v178
  %v197 = vpack.c.bf16 %v181, %v179
  %v198 = vld [vmem:[%s1] sm:$0xff]
  %v199 = vpack.c.bf16 %v198, %v198
  %200 = vmatprep.subr.bf16.mxu0 %v197
  %201 = vmatpush1.bf16.msra.mxu0 %v196
  %202 = vmatprep.subr.bf16.mxu0 %v195
  %203 = vmatpush1.bf16.msra.mxu0 %v194
  %204 = vmatprep.subr.bf16.mxu0 %v193
  %205 = vmatpush1.bf16.msra.mxu0 %v192
  %206 = vmatprep.subr.bf16.mxu0 %v191
  %207 = vmatpush1.bf16.msra.mxu0 %v190
  %208 = vmatprep.subr.bf16.mxu0 %v189
  %209 = vmatpush1.bf16.msra.mxu0 %v188
  %210 = vmatprep.subr.bf16.mxu0 %v187
  %211 = vmatpush1.bf16.msra.mxu0 %v186
  %212 = vmatprep.subr.bf16.mxu0 %v185
  %213 = vmatpush1.bf16.msra.mxu0 %v184
  %214 = vmatprep.subr.bf16.mxu0 %v183
  %215 = vmatpush1.bf16.msra.mxu0 %v182
  %216 = vmatprep.subr.bf16.mxu0 0
  %217 = vmatpush2.bf16.msra.mxu0 0
  %218 = vmatprep.subr.bf16.mxu0 0
  %219 = vmatpush2.bf16.msra.mxu0 0
  %220 = vmatprep.subr.bf16.mxu0 0
  %221 = vmatpush2.bf16.msra.mxu0 0
  %222 = vmatprep.subr.bf16.mxu0 0
  %223 = vmatpush2.bf16.msra.mxu0 0
  %224 = vmatprep.subr.bf16.mxu0 0
  %225 = vmatpush2.bf16.msra.mxu0 0
  %226 = vmatprep.subr.bf16.mxu0 0
  %227 = vmatpush2.bf16.msra.mxu0 0
  %228 = vmatprep.subr.bf16.mxu0 0
  %229 = vmatpush2.bf16.msra.mxu0 0
  %230 = vmatprep.subr.bf16.mxu0 0
  %231 = vmatpush2.bf16.msra.mxu0 0
  %232 = vmatprep.mubr.bf16.mxu0 0
  %233 = vmatmul.mubr.bf16.gmra.mxu0 %v199
  %v234 = vpop.f32.mrf.mxu0
  %v235 = vadd.f32 0.0, %v234
  %v236 = vpop.f32.mrf.mxu0
  %v237 = vadd.f32 0.0, %v236
  %v238 = vpop.f32.mrf.mxu0
  %v239 = vpop.f32.mrf.mxu0
  %240 = vdwg.mxu0
  %v241 = vld [vmem:[%s2] sm:$0xff]
  %v242 = vld [vmem:[%s2 + $0x8] sm:$0xff]
  %v243 = vadd.f32 %v241, %v235
  %v244 = vadd.f32 %v242, %v237
  %245 = vst [vmem:[%s3] sm:$0xff] %v243
  %246 = vst [vmem:[%s3 + $0x8] sm:$0xff] %v244
  // Predicated region
  $region14: #{sp_intra_att_v3.5} parent=0 // pred_check
    _
  $region15: #{sp_intra_att_v3.5} parent=0 // pred_check_branch
    %248 = sbr.rel (0) target = $region17
  $region16: #{sp_intra_att_v3.5} parent=0 // pred_region
    _
  $region17: #{sp_intra_att_v3.5} parent=0 // pred_fallthru
    _
  // Predicated region
  $region18: #{sp_intra_att_v3.5} parent=0 // pred_check
    _
  $region19: #{sp_intra_att_v3.5} parent=0 // pred_check_branch
    %250 = sbr.rel (0) target = $region21
  $region20: #{sp_intra_att_v3.5} parent=0 // pred_region
    _
  $region21: #{sp_intra_att_v3.5} parent=0 // pred_fallthru
    _

// kernel: sp_intra_att_v3.4
$region0: #{sp_intra_att_v3.4}
  #allocation0 [shape = 'u32[]', space=smem, size = 0x4, offset = 0x4, fixed_abs, tag = 'smem constant byte address 0x4 - core index']
  #allocation1 [shape = 'u32[144,128]{1,0:T(1,128)}', space=vmem, size = 0x12000, scoped, tag = 'internal scratch']
  %s0 = inlined_call_operand.vmem [shape: f32[2,8,4,16], index: 0, kind: input, shape index: {}]
  %s1 = inlined_call_operand.vmem [shape: f32[2,8,4,16], index: 1, kind: input, shape index: {}]
  %s2 = inlined_call_operand.vmem [shape: f32[2,8,4,16], index: 2, kind: input, shape index: {}]
  %s3 = inlined_call_operand.vmem [shape: f32[8,16], index: 3, kind: input, shape index: {}]
  %s4 = inlined_call_operand.vmem [shape: f32[8,16], index: 4, kind: input, shape index: {}]
  %s5 = inlined_call_operand.vmem [shape: f32[2,8,4,16], index: 5, kind: output, shape index: {}]
  %s6 = sld [smem:[#allocation0]]
  $region30: #{sp_intra_att_v3.4} parent=0
    _
  %s8 = ssub.s32 1, %s6
  %s9 = scalar_select 0, %s8, %s6
  // Predicated region
  $region2: #{sp_intra_att_v3.4} parent=0 // pred_check
    _
  $region3: #{sp_intra_att_v3.4} parent=0 // pred_check_branch
    %11 = sbr.rel (0) target = $region5
  $region4: #{sp_intra_att_v3.4} parent=0 // pred_region
    _
  $region5: #{sp_intra_att_v3.4} parent=0 // pred_fallthru
    _
  // Predicated region
  $region6: #{sp_intra_att_v3.4} parent=0 // pred_check
    _
  $region7: #{sp_intra_att_v3.4} parent=0 // pred_check_branch
    %13 = sbr.rel (0) target = $region9
  $region8: #{sp_intra_att_v3.4} parent=0 // pred_region
    _
  $region9: #{sp_intra_att_v3.4} parent=0 // pred_fallthru
    _
  // Predicated region
  $region10: #{sp_intra_att_v3.4} parent=0 // pred_check
    _
  $region11: #{sp_intra_att_v3.4} parent=0 // pred_check_branch
    %15 = sbr.rel (0) target = $region13
  $region12: #{sp_intra_att_v3.4} parent=0 // pred_region
    _
  $region13: #{sp_intra_att_v3.4} parent=0 // pred_fallthru
    _
  // Predicated region
  $region14: #{sp_intra_att_v3.4} parent=0 // pred_check
    _
  $region15: #{sp_intra_att_v3.4} parent=0 // pred_check_branch
    %17 = sbr.rel (0) target = $region17
  $region16: #{sp_intra_att_v3.4} parent=0 // pred_region
    _
  $region17: #{sp_intra_att_v3.4} parent=0 // pred_fallthru
    _
  // Predicated region
  $region18: #{sp_intra_att_v3.4} parent=0 // pred_check
    _
  $region19: #{sp_intra_att_v3.4} parent=0 // pred_check_branch
    %19 = sbr.rel (0) target = $region21
  $region20: #{sp_intra_att_v3.4} parent=0 // pred_region
    _
  $region21: #{sp_intra_att_v3.4} parent=0 // pred_fallthru
    _
  %v20 = vld [vmem:[%s3] sm:$0xff]
  %v22 = vcombine.high %v20, %v20
  %v24 = vunpack.c.l.s4 1966171168
  %v25 = vunpack.c.0.s8 %v24
  %v26 = vlaneseq
  %v27 = vshrl.u32 %v26, 7
  %v28 = vsub.s32 %v25, %v27
  %v29 = vrot.slane %v20, %v28
  %v31 = vunpack.c.l.s4 1966171168
  %v32 = vunpack.c.0.s8 %v31
  %v33 = vlaneseq
  %v34 = vshrl.u32 %v33, 7
  %v35 = vsub.s32 %v32, %v34
  %v36 = vrot.slane %v22, %v35
  %v37 = vcombine.high %v29, %v29
  %v38 = vcombine.high %v36, %v36
  %v40 = vunpack.c.l.s4 1966171168
  %v41 = vunpack.c.0.s8 %v40
  %v42 = vlaneseq
  %v43 = vshrl.u32 %v42, 7
  %v44 = vsub.s32 %v41, %v43
  %v45 = vrot.slane %v29, %v44
  %v47 = vunpack.c.l.s4 1966171168
  %v48 = vunpack.c.0.s8 %v47
  %v49 = vlaneseq
  %v50 = vshrl.u32 %v49, 7
  %v51 = vsub.s32 %v48, %v50
  %v52 = vrot.slane %v36, %v51
  %v54 = vunpack.c.l.s4 1966171168
  %v55 = vunpack.c.0.s8 %v54
  %v56 = vlaneseq
  %v57 = vshrl.u32 %v56, 7
  %v58 = vsub.s32 %v55, %v57
  %v59 = vrot.slane %v37, %v58
  %v61 = vunpack.c.l.s4 1966171168
  %v62 = vunpack.c.0.s8 %v61
  %v63 = vlaneseq
  %v64 = vshrl.u32 %v63, 7
  %v65 = vsub.s32 %v62, %v64
  %v66 = vrot.slane %v38, %v65
  %v67 = vcombine.high %v45, %v45
  %v68 = vcombine.high %v52, %v52
  %v69 = vcombine.high %v59, %v59
  %v70 = vcombine.high %v66, %v66
  %v71 = vld [vmem:[%s4] sm:$0xff]
  %v73 = vcombine.high %v71, %v71
  %v75 = vunpack.c.l.s4 1966171168
  %v76 = vunpack.c.0.s8 %v75
  %v77 = vlaneseq
  %v78 = vshrl.u32 %v77, 7
  %v79 = vsub.s32 %v76, %v78
  %v80 = vrot.slane %v71, %v79
  %v82 = vunpack.c.l.s4 1966171168
  %v83 = vunpack.c.0.s8 %v82
  %v84 = vlaneseq
  %v85 = vshrl.u32 %v84, 7
  %v86 = vsub.s32 %v83, %v85
  %v87 = vrot.slane %v73, %v86
  %v88 = vcombine.high %v80, %v80
  %v89 = vcombine.high %v87, %v87
  %v91 = vunpack.c.l.s4 1966171168
  %v92 = vunpack.c.0.s8 %v91
  %v93 = vlaneseq
  %v94 = vshrl.u32 %v93, 7
  %v95 = vsub.s32 %v92, %v94
  %v96 = vrot.slane %v80, %v95
  %v98 = vunpack.c.l.s4 1966171168
  %v99 = vunpack.c.0.s8 %v98
  %v100 = vlaneseq
  %v101 = vshrl.u32 %v100, 7
  %v102 = vsub.s32 %v99, %v101
  %v103 = vrot.slane %v87, %v102
  %v105 = vunpack.c.l.s4 1966171168
  %v106 = vunpack.c.0.s8 %v105
  %v107 = vlaneseq
  %v108 = vshrl.u32 %v107, 7
  %v109 = vsub.s32 %v106, %v108
  %v110 = vrot.slane %v88, %v109
  %v112 = vunpack.c.l.s4 1966171168
  %v113 = vunpack.c.0.s8 %v112
  %v114 = vlaneseq
  %v115 = vshrl.u32 %v114, 7
  %v116 = vsub.s32 %v113, %v115
  %v117 = vrot.slane %v89, %v116
  %v118 = vcombine.high %v96, %v96
  %v119 = vcombine.high %v103, %v103
  %v120 = vcombine.high %v110, %v110
  %v121 = vcombine.high %v117, %v117
  %v122 = vld [vmem:[%s0] sm:$0xf]
  %v123 = vld [vmem:[%s0 + $0x4] sm:$0xf]
  %v124 = vld [vmem:[%s0 + $0x8] sm:$0xf]
  %v125 = vld [vmem:[%s0 + $0xc] sm:$0xf]
  %v126 = vld [vmem:[%s0 + $0x10] sm:$0xf]
  %v127 = vld [vmem:[%s0 + $0x14] sm:$0xf]
  %v128 = vld [vmem:[%s0 + $0x18] sm:$0xf]
  %v129 = vld [vmem:[%s0 + $0x1c] sm:$0xf]
  %v130 = vld [vmem:[%s0 + $0x20] sm:$0xf]
  %v131 = vld [vmem:[%s0 + $0x24] sm:$0xf]
  %v132 = vld [vmem:[%s0 + $0x28] sm:$0xf]
  %v133 = vld [vmem:[%s0 + $0x2c] sm:$0xf]
  %v134 = vld [vmem:[%s0 + $0x30] sm:$0xf]
  %v135 = vld [vmem:[%s0 + $0x34] sm:$0xf]
  %v136 = vld [vmem:[%s0 + $0x38] sm:$0xf]
  %v137 = vld [vmem:[%s0 + $0x3c] sm:$0xf]
  %v138 = vld [vmem:[%s1] sm:$0xf]
  %v139 = vld [vmem:[%s1 + $0x4] sm:$0xf]
  %v140 = vld [vmem:[%s1 + $0x8] sm:$0xf]
  %v141 = vld [vmem:[%s1 + $0xc] sm:$0xf]
  %v142 = vld [vmem:[%s1 + $0x10] sm:$0xf]
  %v143 = vld [vmem:[%s1 + $0x14] sm:$0xf]
  %v144 = vld [vmem:[%s1 + $0x18] sm:$0xf]
  %v145 = vld [vmem:[%s1 + $0x1c] sm:$0xf]
  %v146 = vld [vmem:[%s1 + $0x20] sm:$0xf]
  %v147 = vld [vmem:[%s1 + $0x24] sm:$0xf]
  %v148 = vld [vmem:[%s1 + $0x28] sm:$0xf]
  %v149 = vld [vmem:[%s1 + $0x2c] sm:$0xf]
  %v150 = vld [vmem:[%s1 + $0x30] sm:$0xf]
  %v151 = vld [vmem:[%s1 + $0x34] sm:$0xf]
  %v152 = vld [vmem:[%s1 + $0x38] sm:$0xf]
  %v153 = vld [vmem:[%s1 + $0x3c] sm:$0xf]
  %v154 = vlaneseq
  %v155 = vshrl.u32 %v154, 7
  %v156 = vsub.s32 0, %v155
  %v157 = vrot.slane %v45, %v156
  %v158 = vlaneseq
  %v159 = vshrl.u32 %v158, 7
  %v160 = vsub.s32 0, %v159
  %v161 = vrot.slane %v59, %v160
  %v162 = vlaneseq
  %v163 = vshrl.u32 %v162, 7
  %v164 = vsub.s32 0, %v163
  %v165 = vrot.slane %v67, %v164
  %v166 = vlaneseq
  %v167 = vshrl.u32 %v166, 7
  %v168 = vsub.s32 0, %v167
  %v169 = vrot.slane %v69, %v168
  %v170 = vlaneseq
  %v171 = vshrl.u32 %v170, 7
  %v172 = vsub.s32 0, %v171
  %v173 = vrot.slane %v52, %v172
  %v174 = vlaneseq
  %v175 = vshrl.u32 %v174, 7
  %v176 = vsub.s32 0, %v175
  %v177 = vrot.slane %v66, %v176
  %v178 = vlaneseq
  %v179 = vshrl.u32 %v178, 7
  %v180 = vsub.s32 0, %v179
  %v181 = vrot.slane %v68, %v180
  %v182 = vlaneseq
  %v183 = vshrl.u32 %v182, 7
  %v184 = vsub.s32 0, %v183
  %v185 = vrot.slane %v70, %v184
  %v194 = vmul.f32 %v138, %v157
  %v195 = vmul.f32 %v139, %v161
  %v196 = vmul.f32 %v140, %v165
  %v197 = vmul.f32 %v141, %v169
  %v198 = vmul.f32 %v142, %v173
  %v199 = vmul.f32 %v143, %v177
  %v200 = vmul.f32 %v144, %v181
  %v201 = vmul.f32 %v145, %v185
  %v202 = vmul.f32 %v146, %v157
  %v203 = vmul.f32 %v147, %v161
  %v204 = vmul.f32 %v148, %v165
  %v205 = vmul.f32 %v149, %v169
  %v206 = vmul.f32 %v150, %v173
  %v207 = vmul.f32 %v151, %v177
  %v208 = vmul.f32 %v152, %v181
  %v209 = vmul.f32 %v153, %v185
  %v210 = vld [vmem:[%s2] sm:$0xf]
  %v211 = vld [vmem:[%s2 + $0x4] sm:$0xf]
  %v212 = vld [vmem:[%s2 + $0x8] sm:$0xf]
  %v213 = vld [vmem:[%s2 + $0xc] sm:$0xf]
  %v214 = vld [vmem:[%s2 + $0x10] sm:$0xf]
  %v215 = vld [vmem:[%s2 + $0x14] sm:$0xf]
  %v216 = vld [vmem:[%s2 + $0x18] sm:$0xf]
  %v217 = vld [vmem:[%s2 + $0x1c] sm:$0xf]
  %v218 = vld [vmem:[%s2 + $0x20] sm:$0xf]
  %v219 = vld [vmem:[%s2 + $0x24] sm:$0xf]
  %v220 = vld [vmem:[%s2 + $0x28] sm:$0xf]
  %v221 = vld [vmem:[%s2 + $0x2c] sm:$0xf]
  %v222 = vld [vmem:[%s2 + $0x30] sm:$0xf]
  %v223 = vld [vmem:[%s2 + $0x34] sm:$0xf]
  %v224 = vld [vmem:[%s2 + $0x38] sm:$0xf]
  %v225 = vld [vmem:[%s2 + $0x3c] sm:$0xf]
  %v226 = vmul.f32 %v210, %v157
  %v227 = vmul.f32 %v211, %v161
  %v228 = vmul.f32 %v212, %v165
  %v229 = vmul.f32 %v213, %v169
  %v230 = vmul.f32 %v214, %v173
  %v231 = vmul.f32 %v215, %v177
  %v232 = vmul.f32 %v216, %v181
  %v233 = vmul.f32 %v217, %v185
  %v234 = vmul.f32 %v218, %v157
  %v235 = vmul.f32 %v219, %v161
  %v236 = vmul.f32 %v220, %v165
  %v237 = vmul.f32 %v221, %v169
  %v238 = vmul.f32 %v222, %v173
  %v239 = vmul.f32 %v223, %v177
  %v240 = vmul.f32 %v224, %v181
  %v241 = vmul.f32 %v225, %v185
  %v242 = vlaneseq
  %v243 = vshrl.u32 %v242, 7
  %v244 = vsub.s32 0, %v243
  %v245 = vrot.slane %v122, %v244
  %v246 = vlaneseq
  %v247 = vshrl.u32 %v246, 7
  %v248 = vsub.s32 0, %v247
  %v249 = vrot.slane %v123, %v248
  %v250 = vlaneseq
  %v251 = vshrl.u32 %v250, 7
  %v252 = vsub.s32 0, %v251
  %v253 = vrot.slane %v124, %v252
  %v254 = vlaneseq
  %v255 = vshrl.u32 %v254, 7
  %v256 = vsub.s32 0, %v255
  %v257 = vrot.slane %v125, %v256
  %v258 = vlaneseq
  %v259 = vshrl.u32 %v258, 7
  %v260 = vsub.s32 0, %v259
  %v261 = vrot.slane %v126, %v260
  %v262 = vlaneseq
  %v263 = vshrl.u32 %v262, 7
  %v264 = vsub.s32 0, %v263
  %v265 = vrot.slane %v127, %v264
  %v266 = vlaneseq
  %v267 = vshrl.u32 %v266, 7
  %v268 = vsub.s32 0, %v267
  %v269 = vrot.slane %v128, %v268
  %v270 = vlaneseq
  %v271 = vshrl.u32 %v270, 7
  %v272 = vsub.s32 0, %v271
  %v273 = vrot.slane %v129, %v272
  %v274 = vlaneseq
  %v275 = vshrl.u32 %v274, 7
  %v276 = vsub.s32 0, %v275
  %v277 = vrot.slane %v130, %v276
  %v278 = vlaneseq
  %v279 = vshrl.u32 %v278, 7
  %v280 = vsub.s32 0, %v279
  %v281 = vrot.slane %v131, %v280
  %v282 = vlaneseq
  %v283 = vshrl.u32 %v282, 7
  %v284 = vsub.s32 0, %v283
  %v285 = vrot.slane %v132, %v284
  %v286 = vlaneseq
  %v287 = vshrl.u32 %v286, 7
  %v288 = vsub.s32 0, %v287
  %v289 = vrot.slane %v133, %v288
  %v290 = vlaneseq
  %v291 = vshrl.u32 %v290, 7
  %v292 = vsub.s32 0, %v291
  %v293 = vrot.slane %v134, %v292
  %v294 = vlaneseq
  %v295 = vshrl.u32 %v294, 7
  %v296 = vsub.s32 0, %v295
  %v297 = vrot.slane %v135, %v296
  %v298 = vlaneseq
  %v299 = vshrl.u32 %v298, 7
  %v300 = vsub.s32 0, %v299
  %v301 = vrot.slane %v136, %v300
  %v302 = vlaneseq
  %v303 = vshrl.u32 %v302, 7
  %v304 = vsub.s32 0, %v303
  %v305 = vrot.slane %v137, %v304
  %v322 = vrot.slane %v195, 7
  %vm323 = vcmask 1041409
  %v324 = vsel %vm323, %v322, %v194
  %v325 = vrot.slane %v196, 6
  %vm326 = vcmask 1042434
  %v327 = vsel %vm326, %v325, %v324
  %v328 = vrot.slane %v197, 5
  %vm329 = vcmask 1043459
  %v330 = vsel %vm329, %v328, %v327
  %v331 = vrot.slane %v198, 4
  %vm332 = vcmask 1044484
  %v333 = vsel %vm332, %v331, %v330
  %v334 = vrot.slane %v199, 3
  %vm335 = vcmask 1045509
  %v336 = vsel %vm335, %v334, %v333
  %v337 = vrot.slane %v200, 2
  %vm338 = vcmask 1046534
  %v339 = vsel %vm338, %v337, %v336
  %v340 = vrot.slane %v201, 1
  %vm341 = vcmask 1047559
  %v342 = vsel %vm341, %v340, %v339
  %v343 = vrot.slane %v203, 7
  %v344 = vsel %vm323, %v343, %v202
  %v345 = vrot.slane %v204, 6
  %v346 = vsel %vm326, %v345, %v344
  %v347 = vrot.slane %v205, 5
  %v348 = vsel %vm329, %v347, %v346
  %v349 = vrot.slane %v206, 4
  %v350 = vsel %vm332, %v349, %v348
  %v351 = vrot.slane %v207, 3
  %v352 = vsel %vm335, %v351, %v350
  %v353 = vrot.slane %v208, 2
  %v354 = vsel %vm338, %v353, %v352
  %v355 = vrot.slane %v209, 1
  %v356 = vsel %vm341, %v355, %v354
  %v359 = vmul.f32 %v245, %v342
  %v360 = vmul.f32 %v249, %v342
  %v361 = vmul.f32 %v253, %v342
  %v362 = vmul.f32 %v257, %v342
  %v363 = vmul.f32 %v261, %v342
  %v364 = vmul.f32 %v265, %v342
  %v365 = vmul.f32 %v269, %v342
  %v366 = vmul.f32 %v273, %v342
  %v367 = vmul.f32 %v277, %v356
  %v368 = vmul.f32 %v281, %v356
  %v369 = vmul.f32 %v285, %v356
  %v370 = vmul.f32 %v289, %v356
  %v371 = vmul.f32 %v293, %v356
  %v372 = vmul.f32 %v297, %v356
  %v373 = vmul.f32 %v301, %v356
  %v374 = vmul.f32 %v305, %v356
  %v375 = vlaneseq
  %v376 = vshrl.u32 %v375, 7
  %v377 = vsub.s32 1, %v376
  %v378 = vrot.slane %v122, %v377
  %v379 = vlaneseq
  %v380 = vshrl.u32 %v379, 7
  %v381 = vsub.s32 1, %v380
  %v382 = vrot.slane %v123, %v381
  %v383 = vlaneseq
  %v384 = vshrl.u32 %v383, 7
  %v385 = vsub.s32 1, %v384
  %v386 = vrot.slane %v124, %v385
  %v387 = vlaneseq
  %v388 = vshrl.u32 %v387, 7
  %v389 = vsub.s32 1, %v388
  %v390 = vrot.slane %v125, %v389
  %v391 = vlaneseq
  %v392 = vshrl.u32 %v391, 7
  %v393 = vsub.s32 1, %v392
  %v394 = vrot.slane %v126, %v393
  %v395 = vlaneseq
  %v396 = vshrl.u32 %v395, 7
  %v397 = vsub.s32 1, %v396
  %v398 = vrot.slane %v127, %v397
  %v399 = vlaneseq
  %v400 = vshrl.u32 %v399, 7
  %v401 = vsub.s32 1, %v400
  %v402 = vrot.slane %v128, %v401
  %v403 = vlaneseq
  %v404 = vshrl.u32 %v403, 7
  %v405 = vsub.s32 1, %v404
  %v406 = vrot.slane %v129, %v405
  %v407 = vlaneseq
  %v408 = vshrl.u32 %v407, 7
  %v409 = vsub.s32 1, %v408
  %v410 = vrot.slane %v130, %v409
  %v411 = vlaneseq
  %v412 = vshrl.u32 %v411, 7
  %v413 = vsub.s32 1, %v412
  %v414 = vrot.slane %v131, %v413
  %v415 = vlaneseq
  %v416 = vshrl.u32 %v415, 7
  %v417 = vsub.s32 1, %v416
  %v418 = vrot.slane %v132, %v417
  %v419 = vlaneseq
  %v420 = vshrl.u32 %v419, 7
  %v421 = vsub.s32 1, %v420
  %v422 = vrot.slane %v133, %v421
  %v423 = vlaneseq
  %v424 = vshrl.u32 %v423, 7
  %v425 = vsub.s32 1, %v424
  %v426 = vrot.slane %v134, %v425
  %v427 = vlaneseq
  %v428 = vshrl.u32 %v427, 7
  %v429 = vsub.s32 1, %v428
  %v430 = vrot.slane %v135, %v429
  %v431 = vlaneseq
  %v432 = vshrl.u32 %v431, 7
  %v433 = vsub.s32 1, %v432
  %v434 = vrot.slane %v136, %v433
  %v435 = vlaneseq
  %v436 = vshrl.u32 %v435, 7
  %v437 = vsub.s32 1, %v436
  %v438 = vrot.slane %v137, %v437
  %v439 = vrot.slane %v194, 1
  %v440 = vsel %vm323, %v195, %v439
  %v441 = vrot.slane %v196, 7
  %v442 = vsel %vm326, %v441, %v440
  %v443 = vrot.slane %v197, 6
  %v444 = vsel %vm329, %v443, %v442
  %v445 = vrot.slane %v198, 5
  %v446 = vsel %vm332, %v445, %v444
  %v447 = vrot.slane %v199, 4
  %v448 = vsel %vm335, %v447, %v446
  %v449 = vrot.slane %v200, 3
  %v450 = vsel %vm338, %v449, %v448
  %v451 = vrot.slane %v201, 2
  %v452 = vsel %vm341, %v451, %v450
  %v453 = vrot.slane %v202, 1
  %v454 = vsel %vm323, %v203, %v453
  %v455 = vrot.slane %v204, 7
  %v456 = vsel %vm326, %v455, %v454
  %v457 = vrot.slane %v205, 6
  %v458 = vsel %vm329, %v457, %v456
  %v459 = vrot.slane %v206, 5
  %v460 = vsel %vm332, %v459, %v458
  %v461 = vrot.slane %v207, 4
  %v462 = vsel %vm335, %v461, %v460
  %v463 = vrot.slane %v208, 3
  %v464 = vsel %vm338, %v463, %v462
  %v465 = vrot.slane %v209, 2
  %v466 = vsel %vm341, %v465, %v464
  %v469 = vmul.f32 %v378, %v452
  %v470 = vmul.f32 %v382, %v452
  %v471 = vmul.f32 %v386, %v452
  %v472 = vmul.f32 %v390, %v452
  %v473 = vmul.f32 %v394, %v452
  %v474 = vmul.f32 %v398, %v452
  %v475 = vmul.f32 %v402, %v452
  %v476 = vmul.f32 %v406, %v452
  %v477 = vmul.f32 %v410, %v466
  %v478 = vmul.f32 %v414, %v466
  %v479 = vmul.f32 %v418, %v466
  %v480 = vmul.f32 %v422, %v466
  %v481 = vmul.f32 %v426, %v466
  %v482 = vmul.f32 %v430, %v466
  %v483 = vmul.f32 %v434, %v466
  %v484 = vmul.f32 %v438, %v466
  %v485 = vadd.f32 %v359, %v469
  %v486 = vadd.f32 %v360, %v470
  %v487 = vadd.f32 %v361, %v471
  %v488 = vadd.f32 %v362, %v472
  %v489 = vadd.f32 %v363, %v473
  %v490 = vadd.f32 %v364, %v474
  %v491 = vadd.f32 %v365, %v475
  %v492 = vadd.f32 %v366, %v476
  %v493 = vadd.f32 %v367, %v477
  %v494 = vadd.f32 %v368, %v478
  %v495 = vadd.f32 %v369, %v479
  %v496 = vadd.f32 %v370, %v480
  %v497 = vadd.f32 %v371, %v481
  %v498 = vadd.f32 %v372, %v482
  %v499 = vadd.f32 %v373, %v483
  %v500 = vadd.f32 %v374, %v484
  %v501 = vlaneseq
  %v502 = vshrl.u32 %v501, 7
  %v503 = vsub.s32 2, %v502
  %v504 = vrot.slane %v122, %v503
  %v505 = vlaneseq
  %v506 = vshrl.u32 %v505, 7
  %v507 = vsub.s32 2, %v506
  %v508 = vrot.slane %v123, %v507
  %v509 = vlaneseq
  %v510 = vshrl.u32 %v509, 7
  %v511 = vsub.s32 2, %v510
  %v512 = vrot.slane %v124, %v511
  %v513 = vlaneseq
  %v514 = vshrl.u32 %v513, 7
  %v515 = vsub.s32 2, %v514
  %v516 = vrot.slane %v125, %v515
  %v517 = vlaneseq
  %v518 = vshrl.u32 %v517, 7
  %v519 = vsub.s32 2, %v518
  %v520 = vrot.slane %v126, %v519
  %v521 = vlaneseq
  %v522 = vshrl.u32 %v521, 7
  %v523 = vsub.s32 2, %v522
  %v524 = vrot.slane %v127, %v523
  %v525 = vlaneseq
  %v526 = vshrl.u32 %v525, 7
  %v527 = vsub.s32 2, %v526
  %v528 = vrot.slane %v128, %v527
  %v529 = vlaneseq
  %v530 = vshrl.u32 %v529, 7
  %v531 = vsub.s32 2, %v530
  %v532 = vrot.slane %v129, %v531
  %v533 = vlaneseq
  %v534 = vshrl.u32 %v533, 7
  %v535 = vsub.s32 2, %v534
  %v536 = vrot.slane %v130, %v535
  %v537 = vlaneseq
  %v538 = vshrl.u32 %v537, 7
  %v539 = vsub.s32 2, %v538
  %v540 = vrot.slane %v131, %v539
  %v541 = vlaneseq
  %v542 = vshrl.u32 %v541, 7
  %v543 = vsub.s32 2, %v542
  %v544 = vrot.slane %v132, %v543
  %v545 = vlaneseq
  %v546 = vshrl.u32 %v545, 7
  %v547 = vsub.s32 2, %v546
  %v548 = vrot.slane %v133, %v547
  %v549 = vlaneseq
  %v550 = vshrl.u32 %v549, 7
  %v551 = vsub.s32 2, %v550
  %v552 = vrot.slane %v134, %v551
  %v553 = vlaneseq
  %v554 = vshrl.u32 %v553, 7
  %v555 = vsub.s32 2, %v554
  %v556 = vrot.slane %v135, %v555
  %v557 = vlaneseq
  %v558 = vshrl.u32 %v557, 7
  %v559 = vsub.s32 2, %v558
  %v560 = vrot.slane %v136, %v559
  %v561 = vlaneseq
  %v562 = vshrl.u32 %v561, 7
  %v563 = vsub.s32 2, %v562
  %v564 = vrot.slane %v137, %v563
  %v565 = vrot.slane %v194, 2
  %v566 = vrot.slane %v195, 1
  %v567 = vsel %vm323, %v566, %v565
  %v568 = vsel %vm326, %v196, %v567
  %v569 = vrot.slane %v197, 7
  %v570 = vsel %vm329, %v569, %v568
  %v571 = vrot.slane %v198, 6
  %v572 = vsel %vm332, %v571, %v570
  %v573 = vrot.slane %v199, 5
  %v574 = vsel %vm335, %v573, %v572
  %v575 = vrot.slane %v200, 4
  %v576 = vsel %vm338, %v575, %v574
  %v577 = vrot.slane %v201, 3
  %v578 = vsel %vm341, %v577, %v576
  %v579 = vrot.slane %v202, 2
  %v580 = vrot.slane %v203, 1
  %v581 = vsel %vm323, %v580, %v579
  %v582 = vsel %vm326, %v204, %v581
  %v583 = vrot.slane %v205, 7
  %v584 = vsel %vm329, %v583, %v582
  %v585 = vrot.slane %v206, 6
  %v586 = vsel %vm332, %v585, %v584
  %v587 = vrot.slane %v207, 5
  %v588 = vsel %vm335, %v587, %v586
  %v589 = vrot.slane %v208, 4
  %v590 = vsel %vm338, %v589, %v588
  %v591 = vrot.slane %v209, 3
  %v592 = vsel %vm341, %v591, %v590
  %v595 = vmul.f32 %v504, %v578
  %v596 = vmul.f32 %v508, %v578
  %v597 = vmul.f32 %v512, %v578
  %v598 = vmul.f32 %v516, %v578
  %v599 = vmul.f32 %v520, %v578
  %v600 = vmul.f32 %v524, %v578
  %v601 = vmul.f32 %v528, %v578
  %v602 = vmul.f32 %v532, %v578
  %v603 = vmul.f32 %v536, %v592
  %v604 = vmul.f32 %v540, %v592
  %v605 = vmul.f32 %v544, %v592
  %v606 = vmul.f32 %v548, %v592
  %v607 = vmul.f32 %v552, %v592
  %v608 = vmul.f32 %v556, %v592
  %v609 = vmul.f32 %v560, %v592
  %v610 = vmul.f32 %v564, %v592
  %v611 = vadd.f32 %v485, %v595
  %v612 = vadd.f32 %v486, %v596
  %v613 = vadd.f32 %v487, %v597
  %v614 = vadd.f32 %v488, %v598
  %v615 = vadd.f32 %v489, %v599
  %v616 = vadd.f32 %v490, %v600
  %v617 = vadd.f32 %v491, %v601
  %v618 = vadd.f32 %v492, %v602
  %v619 = vadd.f32 %v493, %v603
  %v620 = vadd.f32 %v494, %v604
  %v621 = vadd.f32 %v495, %v605
  %v622 = vadd.f32 %v496, %v606
  %v623 = vadd.f32 %v497, %v607
  %v624 = vadd.f32 %v498, %v608
  %v625 = vadd.f32 %v499, %v609
  %v626 = vadd.f32 %v500, %v610
  %v627 = vlaneseq
  %v628 = vshrl.u32 %v627, 7
  %v629 = vsub.s32 3, %v628
  %v630 = vrot.slane %v122, %v629
  %v631 = vlaneseq
  %v632 = vshrl.u32 %v631, 7
  %v633 = vsub.s32 3, %v632
  %v634 = vrot.slane %v123, %v633
  %v635 = vlaneseq
  %v636 = vshrl.u32 %v635, 7
  %v637 = vsub.s32 3, %v636
  %v638 = vrot.slane %v124, %v637
  %v639 = vlaneseq
  %v640 = vshrl.u32 %v639, 7
  %v641 = vsub.s32 3, %v640
  %v642 = vrot.slane %v125, %v641
  %v643 = vlaneseq
  %v644 = vshrl.u32 %v643, 7
  %v645 = vsub.s32 3, %v644
  %v646 = vrot.slane %v126, %v645
  %v647 = vlaneseq
  %v648 = vshrl.u32 %v647, 7
  %v649 = vsub.s32 3, %v648
  %v650 = vrot.slane %v127, %v649
  %v651 = vlaneseq
  %v652 = vshrl.u32 %v651, 7
  %v653 = vsub.s32 3, %v652
  %v654 = vrot.slane %v128, %v653
  %v655 = vlaneseq
  %v656 = vshrl.u32 %v655, 7
  %v657 = vsub.s32 3, %v656
  %v658 = vrot.slane %v129, %v657
  %v659 = vlaneseq
  %v660 = vshrl.u32 %v659, 7
  %v661 = vsub.s32 3, %v660
  %v662 = vrot.slane %v130, %v661
  %v663 = vlaneseq
  %v664 = vshrl.u32 %v663, 7
  %v665 = vsub.s32 3, %v664
  %v666 = vrot.slane %v131, %v665
  %v667 = vlaneseq
  %v668 = vshrl.u32 %v667, 7
  %v669 = vsub.s32 3, %v668
  %v670 = vrot.slane %v132, %v669
  %v671 = vlaneseq
  %v672 = vshrl.u32 %v671, 7
  %v673 = vsub.s32 3, %v672
  %v674 = vrot.slane %v133, %v673
  %v675 = vlaneseq
  %v676 = vshrl.u32 %v675, 7
  %v677 = vsub.s32 3, %v676
  %v678 = vrot.slane %v134, %v677
  %v679 = vlaneseq
  %v680 = vshrl.u32 %v679, 7
  %v681 = vsub.s32 3, %v680
  %v682 = vrot.slane %v135, %v681
  %v683 = vlaneseq
  %v684 = vshrl.u32 %v683, 7
  %v685 = vsub.s32 3, %v684
  %v686 = vrot.slane %v136, %v685
  %v687 = vlaneseq
  %v688 = vshrl.u32 %v687, 7
  %v689 = vsub.s32 3, %v688
  %v690 = vrot.slane %v137, %v689
  %v691 = vrot.slane %v194, 3
  %v692 = vrot.slane %v195, 2
  %v693 = vsel %vm323, %v692, %v691
  %v694 = vrot.slane %v196, 1
  %v695 = vsel %vm326, %v694, %v693
  %v696 = vsel %vm329, %v197, %v695
  %v697 = vrot.slane %v198, 7
  %v698 = vsel %vm332, %v697, %v696
  %v699 = vrot.slane %v199, 6
  %v700 = vsel %vm335, %v699, %v698
  %v701 = vrot.slane %v200, 5
  %v702 = vsel %vm338, %v701, %v700
  %v703 = vrot.slane %v201, 4
  %v704 = vsel %vm341, %v703, %v702
  %v705 = vrot.slane %v202, 3
  %v706 = vrot.slane %v203, 2
  %v707 = vsel %vm323, %v706, %v705
  %v708 = vrot.slane %v204, 1
  %v709 = vsel %vm326, %v708, %v707
  %v710 = vsel %vm329, %v205, %v709
  %v711 = vrot.slane %v206, 7
  %v712 = vsel %vm332, %v711, %v710
  %v713 = vrot.slane %v207, 6
  %v714 = vsel %vm335, %v713, %v712
  %v715 = vrot.slane %v208, 5
  %v716 = vsel %vm338, %v715, %v714
  %v717 = vrot.slane %v209, 4
  %v718 = vsel %vm341, %v717, %v716
  %v721 = vmul.f32 %v630, %v704
  %v722 = vmul.f32 %v634, %v704
  %v723 = vmul.f32 %v638, %v704
  %v724 = vmul.f32 %v642, %v704
  %v725 = vmul.f32 %v646, %v704
  %v726 = vmul.f32 %v650, %v704
  %v727 = vmul.f32 %v654, %v704
  %v728 = vmul.f32 %v658, %v704
  %v729 = vmul.f32 %v662, %v718
  %v730 = vmul.f32 %v666, %v718
  %v731 = vmul.f32 %v670, %v718
  %v732 = vmul.f32 %v674, %v718
  %v733 = vmul.f32 %v678, %v718
  %v734 = vmul.f32 %v682, %v718
  %v735 = vmul.f32 %v686, %v718
  %v736 = vmul.f32 %v690, %v718
  %v737 = vadd.f32 %v611, %v721
  %v738 = vadd.f32 %v612, %v722
  %v739 = vadd.f32 %v613, %v723
  %v740 = vadd.f32 %v614, %v724
  %v741 = vadd.f32 %v615, %v725
  %v742 = vadd.f32 %v616, %v726
  %v743 = vadd.f32 %v617, %v727
  %v744 = vadd.f32 %v618, %v728
  %v745 = vadd.f32 %v619, %v729
  %v746 = vadd.f32 %v620, %v730
  %v747 = vadd.f32 %v621, %v731
  %v748 = vadd.f32 %v622, %v732
  %v749 = vadd.f32 %v623, %v733
  %v750 = vadd.f32 %v624, %v734
  %v751 = vadd.f32 %v625, %v735
  %v752 = vadd.f32 %v626, %v736
  %v753 = vmul.f32 %v737, 0.5
  %v754 = vmul.f32 %v738, 0.5
  %v755 = vmul.f32 %v739, 0.5
  %v756 = vmul.f32 %v740, 0.5
  %v757 = vmul.f32 %v741, 0.5
  %v758 = vmul.f32 %v742, 0.5
  %v759 = vmul.f32 %v743, 0.5
  %v760 = vmul.f32 %v744, 0.5
  %v761 = vmul.f32 %v745, 0.5
  %v762 = vmul.f32 %v746, 0.5
  %v763 = vmul.f32 %v747, 0.5
  %v764 = vmul.f32 %v748, 0.5
  %v765 = vmul.f32 %v749, 0.5
  %v766 = vmul.f32 %v750, 0.5
  %v767 = vmul.f32 %v751, 0.5
  %v768 = vmul.f32 %v752, 0.5
  %vm769 = vcmask 130048
  %v770 = vsel %vm769, %v753, -inf
  %v771 = vrot.slane %v770, 4
  %v772 = vmax.f32 %v770, %v771
  %v773 = vrot.slane %v772, 2
  %v774 = vmax.f32 %v772, %v773
  %v775 = vrot.slane %v774, 1
  %v776 = vmax.f32 %v774, %v775
  %v777 = vsel %vm769, %v754, -inf
  %v778 = vrot.slane %v777, 4
  %v779 = vmax.f32 %v777, %v778
  %v780 = vrot.slane %v779, 2
  %v781 = vmax.f32 %v779, %v780
  %v782 = vrot.slane %v781, 1
  %v783 = vmax.f32 %v781, %v782
  %v784 = vsel %vm769, %v755, -inf
  %v785 = vrot.slane %v784, 4
  %v786 = vmax.f32 %v784, %v785
  %v787 = vrot.slane %v786, 2
  %v788 = vmax.f32 %v786, %v787
  %v789 = vrot.slane %v788, 1
  %v790 = vmax.f32 %v788, %v789
  %v791 = vsel %vm769, %v756, -inf
  %v792 = vrot.slane %v791, 4
  %v793 = vmax.f32 %v791, %v792
  %v794 = vrot.slane %v793, 2
  %v795 = vmax.f32 %v793, %v794
  %v796 = vrot.slane %v795, 1
  %v797 = vmax.f32 %v795, %v796
  %v798 = vsel %vm769, %v757, -inf
  %v799 = vrot.slane %v798, 4
  %v800 = vmax.f32 %v798, %v799
  %v801 = vrot.slane %v800, 2
  %v802 = vmax.f32 %v800, %v801
  %v803 = vrot.slane %v802, 1
  %v804 = vmax.f32 %v802, %v803
  %v805 = vsel %vm769, %v758, -inf
  %v806 = vrot.slane %v805, 4
  %v807 = vmax.f32 %v805, %v806
  %v808 = vrot.slane %v807, 2
  %v809 = vmax.f32 %v807, %v808
  %v810 = vrot.slane %v809, 1
  %v811 = vmax.f32 %v809, %v810
  %v812 = vsel %vm769, %v759, -inf
  %v813 = vrot.slane %v812, 4
  %v814 = vmax.f32 %v812, %v813
  %v815 = vrot.slane %v814, 2
  %v816 = vmax.f32 %v814, %v815
  %v817 = vrot.slane %v816, 1
  %v818 = vmax.f32 %v816, %v817
  %v819 = vsel %vm769, %v760, -inf
  %v820 = vrot.slane %v819, 4
  %v821 = vmax.f32 %v819, %v820
  %v822 = vrot.slane %v821, 2
  %v823 = vmax.f32 %v821, %v822
  %v824 = vrot.slane %v823, 1
  %v825 = vmax.f32 %v823, %v824
  %v826 = vsel %vm769, %v761, -inf
  %v827 = vrot.slane %v826, 4
  %v828 = vmax.f32 %v826, %v827
  %v829 = vrot.slane %v828, 2
  %v830 = vmax.f32 %v828, %v829
  %v831 = vrot.slane %v830, 1
  %v832 = vmax.f32 %v830, %v831
  %v833 = vsel %vm769, %v762, -inf
  %v834 = vrot.slane %v833, 4
  %v835 = vmax.f32 %v833, %v834
  %v836 = vrot.slane %v835, 2
  %v837 = vmax.f32 %v835, %v836
  %v838 = vrot.slane %v837, 1
  %v839 = vmax.f32 %v837, %v838
  %v840 = vsel %vm769, %v763, -inf
  %v841 = vrot.slane %v840, 4
  %v842 = vmax.f32 %v840, %v841
  %v843 = vrot.slane %v842, 2
  %v844 = vmax.f32 %v842, %v843
  %v845 = vrot.slane %v844, 1
  %v846 = vmax.f32 %v844, %v845
  %v847 = vsel %vm769, %v764, -inf
  %v848 = vrot.slane %v847, 4
  %v849 = vmax.f32 %v847, %v848
  %v850 = vrot.slane %v849, 2
  %v851 = vmax.f32 %v849, %v850
  %v852 = vrot.slane %v851, 1
  %v853 = vmax.f32 %v851, %v852
  %v854 = vsel %vm769, %v765, -inf
  %v855 = vrot.slane %v854, 4
  %v856 = vmax.f32 %v854, %v855
  %v857 = vrot.slane %v856, 2
  %v858 = vmax.f32 %v856, %v857
  %v859 = vrot.slane %v858, 1
  %v860 = vmax.f32 %v858, %v859
  %v861 = vsel %vm769, %v766, -inf
  %v862 = vrot.slane %v861, 4
  %v863 = vmax.f32 %v861, %v862
  %v864 = vrot.slane %v863, 2
  %v865 = vmax.f32 %v863, %v864
  %v866 = vrot.slane %v865, 1
  %v867 = vmax.f32 %v865, %v866
  %v868 = vsel %vm769, %v767, -inf
  %v869 = vrot.slane %v868, 4
  %v870 = vmax.f32 %v868, %v869
  %v871 = vrot.slane %v870, 2
  %v872 = vmax.f32 %v870, %v871
  %v873 = vrot.slane %v872, 1
  %v874 = vmax.f32 %v872, %v873
  %v875 = vsel %vm769, %v768, -inf
  %v876 = vrot.slane %v875, 4
  %v877 = vmax.f32 %v875, %v876
  %v878 = vrot.slane %v877, 2
  %v879 = vmax.f32 %v877, %v878
  %v880 = vrot.slane %v879, 1
  %v881 = vmax.f32 %v879, %v880
  %v882 = vsub.f32 %v753, %v776
  %v883 = vsub.f32 %v754, %v783
  %v884 = vsub.f32 %v755, %v790
  %v885 = vsub.f32 %v756, %v797
  %v886 = vsub.f32 %v757, %v804
  %v887 = vsub.f32 %v758, %v811
  %v888 = vsub.f32 %v759, %v818
  %v889 = vsub.f32 %v760, %v825
  %v890 = vsub.f32 %v761, %v832
  %v891 = vsub.f32 %v762, %v839
  %v892 = vsub.f32 %v763, %v846
  %v893 = vsub.f32 %v764, %v853
  %v894 = vsub.f32 %v765, %v860
  %v895 = vsub.f32 %v766, %v867
  %v896 = vsub.f32 %v767, %v874
  %v897 = vsub.f32 %v768, %v881
  %v898 = vmul.f32 %v882, 1.442695
  %v899 = vpow.pop %v898
  %v900 = vmul.f32 %v883, 1.442695
  %v901 = vpow.pop %v900
  %v902 = vmul.f32 %v884, 1.442695
  %v903 = vpow.pop %v902
  %v904 = vmul.f32 %v885, 1.442695
  %v905 = vpow.pop %v904
  %v906 = vmul.f32 %v886, 1.442695
  %v907 = vpow.pop %v906
  %v908 = vmul.f32 %v887, 1.442695
  %v909 = vpow.pop %v908
  %v910 = vmul.f32 %v888, 1.442695
  %v911 = vpow.pop %v910
  %v912 = vmul.f32 %v889, 1.442695
  %v913 = vpow.pop %v912
  %v914 = vmul.f32 %v890, 1.442695
  %v915 = vpow.pop %v914
  %v916 = vmul.f32 %v891, 1.442695
  %v917 = vpow.pop %v916
  %v918 = vmul.f32 %v892, 1.442695
  %v919 = vpow.pop %v918
  %v920 = vmul.f32 %v893, 1.442695
  %v921 = vpow.pop %v920
  %v922 = vmul.f32 %v894, 1.442695
  %v923 = vpow.pop %v922
  %v924 = vmul.f32 %v895, 1.442695
  %v925 = vpow.pop %v924
  %v926 = vmul.f32 %v896, 1.442695
  %v927 = vpow.pop %v926
  %v928 = vmul.f32 %v897, 1.442695
  %v929 = vpow.pop %v928
  %v930 = vsel %vm769, %v899, 0.0
  %v931 = vrot.slane %v930, 4
  %v932 = vadd.f32 %v930, %v931
  %v933 = vrot.slane %v932, 2
  %v934 = vadd.f32 %v932, %v933
  %v935 = vrot.slane %v934, 1
  %v936 = vadd.f32 %v934, %v935
  %v937 = vsel %vm769, %v901, 0.0
  %v938 = vrot.slane %v937, 4
  %v939 = vadd.f32 %v937, %v938
  %v940 = vrot.slane %v939, 2
  %v941 = vadd.f32 %v939, %v940
  %v942 = vrot.slane %v941, 1
  %v943 = vadd.f32 %v941, %v942
  %v944 = vsel %vm769, %v903, 0.0
  %v945 = vrot.slane %v944, 4
  %v946 = vadd.f32 %v944, %v945
  %v947 = vrot.slane %v946, 2
  %v948 = vadd.f32 %v946, %v947
  %v949 = vrot.slane %v948, 1
  %v950 = vadd.f32 %v948, %v949
  %v951 = vsel %vm769, %v905, 0.0
  %v952 = vrot.slane %v951, 4
  %v953 = vadd.f32 %v951, %v952
  %v954 = vrot.slane %v953, 2
  %v955 = vadd.f32 %v953, %v954
  %v956 = vrot.slane %v955, 1
  %v957 = vadd.f32 %v955, %v956
  %v958 = vsel %vm769, %v907, 0.0
  %v959 = vrot.slane %v958, 4
  %v960 = vadd.f32 %v958, %v959
  %v961 = vrot.slane %v960, 2
  %v962 = vadd.f32 %v960, %v961
  %v963 = vrot.slane %v962, 1
  %v964 = vadd.f32 %v962, %v963
  %v965 = vsel %vm769, %v909, 0.0
  %v966 = vrot.slane %v965, 4
  %v967 = vadd.f32 %v965, %v966
  %v968 = vrot.slane %v967, 2
  %v969 = vadd.f32 %v967, %v968
  %v970 = vrot.slane %v969, 1
  %v971 = vadd.f32 %v969, %v970
  %v972 = vsel %vm769, %v911, 0.0
  %v973 = vrot.slane %v972, 4
  %v974 = vadd.f32 %v972, %v973
  %v975 = vrot.slane %v974, 2
  %v976 = vadd.f32 %v974, %v975
  %v977 = vrot.slane %v976, 1
  %v978 = vadd.f32 %v976, %v977
  %v979 = vsel %vm769, %v913, 0.0
  %v980 = vrot.slane %v979, 4
  %v981 = vadd.f32 %v979, %v980
  %v982 = vrot.slane %v981, 2
  %v983 = vadd.f32 %v981, %v982
  %v984 = vrot.slane %v983, 1
  %v985 = vadd.f32 %v983, %v984
  %v986 = vsel %vm769, %v915, 0.0
  %v987 = vrot.slane %v986, 4
  %v988 = vadd.f32 %v986, %v987
  %v989 = vrot.slane %v988, 2
  %v990 = vadd.f32 %v988, %v989
  %v991 = vrot.slane %v990, 1
  %v992 = vadd.f32 %v990, %v991
  %v993 = vsel %vm769, %v917, 0.0
  %v994 = vrot.slane %v993, 4
  %v995 = vadd.f32 %v993, %v994
  %v996 = vrot.slane %v995, 2
  %v997 = vadd.f32 %v995, %v996
  %v998 = vrot.slane %v997, 1
  %v999 = vadd.f32 %v997, %v998
  %v1000 = vsel %vm769, %v919, 0.0
  %v1001 = vrot.slane %v1000, 4
  %v1002 = vadd.f32 %v1000, %v1001
  %v1003 = vrot.slane %v1002, 2
  %v1004 = vadd.f32 %v1002, %v1003
  %v1005 = vrot.slane %v1004, 1
  %v1006 = vadd.f32 %v1004, %v1005
  %v1007 = vsel %vm769, %v921, 0.0
  %v1008 = vrot.slane %v1007, 4
  %v1009 = vadd.f32 %v1007, %v1008
  %v1010 = vrot.slane %v1009, 2
  %v1011 = vadd.f32 %v1009, %v1010
  %v1012 = vrot.slane %v1011, 1
  %v1013 = vadd.f32 %v1011, %v1012
  %v1014 = vsel %vm769, %v923, 0.0
  %v1015 = vrot.slane %v1014, 4
  %v1016 = vadd.f32 %v1014, %v1015
  %v1017 = vrot.slane %v1016, 2
  %v1018 = vadd.f32 %v1016, %v1017
  %v1019 = vrot.slane %v1018, 1
  %v1020 = vadd.f32 %v1018, %v1019
  %v1021 = vsel %vm769, %v925, 0.0
  %v1022 = vrot.slane %v1021, 4
  %v1023 = vadd.f32 %v1021, %v1022
  %v1024 = vrot.slane %v1023, 2
  %v1025 = vadd.f32 %v1023, %v1024
  %v1026 = vrot.slane %v1025, 1
  %v1027 = vadd.f32 %v1025, %v1026
  %v1028 = vsel %vm769, %v927, 0.0
  %v1029 = vrot.slane %v1028, 4
  %v1030 = vadd.f32 %v1028, %v1029
  %v1031 = vrot.slane %v1030, 2
  %v1032 = vadd.f32 %v1030, %v1031
  %v1033 = vrot.slane %v1032, 1
  %v1034 = vadd.f32 %v1032, %v1033
  %v1035 = vsel %vm769, %v929, 0.0
  %v1036 = vrot.slane %v1035, 4
  %v1037 = vadd.f32 %v1035, %v1036
  %v1038 = vrot.slane %v1037, 2
  %v1039 = vadd.f32 %v1037, %v1038
  %v1040 = vrot.slane %v1039, 1
  %v1041 = vadd.f32 %v1039, %v1040
  %v1042 = vrcp.pop %v936
  %v1043 = vrcp.pop %v943
  %v1044 = vrcp.pop %v950
  %v1045 = vrcp.pop %v957
  %v1046 = vrcp.pop %v964
  %v1047 = vrcp.pop %v971
  %v1048 = vrcp.pop %v978
  %v1049 = vrcp.pop %v985
  %v1050 = vrcp.pop %v992
  %v1051 = vrcp.pop %v999
  %v1052 = vrcp.pop %v1006
  %v1053 = vrcp.pop %v1013
  %v1054 = vrcp.pop %v1020
  %v1055 = vrcp.pop %v1027
  %v1056 = vrcp.pop %v1034
  %v1057 = vrcp.pop %v1041
  %v1058 = vmul.f32 %v899, %v1042
  %v1059 = vmul.f32 %v901, %v1043
  %v1060 = vmul.f32 %v903, %v1044
  %v1061 = vmul.f32 %v905, %v1045
  %v1062 = vmul.f32 %v907, %v1046
  %v1063 = vmul.f32 %v909, %v1047
  %v1064 = vmul.f32 %v911, %v1048
  %v1065 = vmul.f32 %v913, %v1049
  %v1066 = vmul.f32 %v915, %v1050
  %v1067 = vmul.f32 %v917, %v1051
  %v1068 = vmul.f32 %v919, %v1052
  %v1069 = vmul.f32 %v921, %v1053
  %v1070 = vmul.f32 %v923, %v1054
  %v1071 = vmul.f32 %v925, %v1055
  %v1072 = vmul.f32 %v927, %v1056
  %v1073 = vmul.f32 %v929, %v1057
  %v1074 = vlaneseq
  %v1075 = vshrl.u32 %v1074, 7
  %v1076 = vsub.s32 0, %v1075
  %v1077 = vrot.slane %v96, %v1076
  %v1078 = vlaneseq
  %v1079 = vshrl.u32 %v1078, 7
  %v1080 = vsub.s32 0, %v1079
  %v1081 = vrot.slane %v110, %v1080
  %v1082 = vlaneseq
  %v1083 = vshrl.u32 %v1082, 7
  %v1084 = vsub.s32 0, %v1083
  %v1085 = vrot.slane %v118, %v1084
  %v1086 = vlaneseq
  %v1087 = vshrl.u32 %v1086, 7
  %v1088 = vsub.s32 0, %v1087
  %v1089 = vrot.slane %v120, %v1088
  %v1090 = vlaneseq
  %v1091 = vshrl.u32 %v1090, 7
  %v1092 = vsub.s32 0, %v1091
  %v1093 = vrot.slane %v103, %v1092
  %v1094 = vlaneseq
  %v1095 = vshrl.u32 %v1094, 7
  %v1096 = vsub.s32 0, %v1095
  %v1097 = vrot.slane %v117, %v1096
  %v1098 = vlaneseq
  %v1099 = vshrl.u32 %v1098, 7
  %v1100 = vsub.s32 0, %v1099
  %v1101 = vrot.slane %v119, %v1100
  %v1102 = vlaneseq
  %v1103 = vshrl.u32 %v1102, 7
  %v1104 = vsub.s32 0, %v1103
  %v1105 = vrot.slane %v121, %v1104
  %v1114 = vmul.f32 %v226, %v1077
  %v1115 = vmul.f32 %v227, %v1081
  %v1116 = vmul.f32 %v228, %v1085
  %v1117 = vmul.f32 %v229, %v1089
  %v1118 = vmul.f32 %v230, %v1093
  %v1119 = vmul.f32 %v231, %v1097
  %v1120 = vmul.f32 %v232, %v1101
  %v1121 = vmul.f32 %v233, %v1105
  %v1122 = vmul.f32 %v234, %v1077
  %v1123 = vmul.f32 %v235, %v1081
  %v1124 = vmul.f32 %v236, %v1085
  %v1125 = vmul.f32 %v237, %v1089
  %v1126 = vmul.f32 %v238, %v1093
  %v1127 = vmul.f32 %v239, %v1097
  %v1128 = vmul.f32 %v240, %v1101
  %v1129 = vmul.f32 %v241, %v1105
  %v1130 = vlaneseq
  %v1131 = vshrl.u32 %v1130, 7
  %v1132 = vsub.s32 0, %v1131
  %v1133 = vrot.slane %v1058, %v1132
  %v1134 = vlaneseq
  %v1135 = vshrl.u32 %v1134, 7
  %v1136 = vsub.s32 0, %v1135
  %v1137 = vrot.slane %v1059, %v1136
  %v1138 = vlaneseq
  %v1139 = vshrl.u32 %v1138, 7
  %v1140 = vsub.s32 0, %v1139
  %v1141 = vrot.slane %v1060, %v1140
  %v1142 = vlaneseq
  %v1143 = vshrl.u32 %v1142, 7
  %v1144 = vsub.s32 0, %v1143
  %v1145 = vrot.slane %v1061, %v1144
  %v1146 = vlaneseq
  %v1147 = vshrl.u32 %v1146, 7
  %v1148 = vsub.s32 0, %v1147
  %v1149 = vrot.slane %v1062, %v1148
  %v1150 = vlaneseq
  %v1151 = vshrl.u32 %v1150, 7
  %v1152 = vsub.s32 0, %v1151
  %v1153 = vrot.slane %v1063, %v1152
  %v1154 = vlaneseq
  %v1155 = vshrl.u32 %v1154, 7
  %v1156 = vsub.s32 0, %v1155
  %v1157 = vrot.slane %v1064, %v1156
  %v1158 = vlaneseq
  %v1159 = vshrl.u32 %v1158, 7
  %v1160 = vsub.s32 0, %v1159
  %v1161 = vrot.slane %v1065, %v1160
  %v1162 = vlaneseq
  %v1163 = vshrl.u32 %v1162, 7
  %v1164 = vsub.s32 0, %v1163
  %v1165 = vrot.slane %v1066, %v1164
  %v1166 = vlaneseq
  %v1167 = vshrl.u32 %v1166, 7
  %v1168 = vsub.s32 0, %v1167
  %v1169 = vrot.slane %v1067, %v1168
  %v1170 = vlaneseq
  %v1171 = vshrl.u32 %v1170, 7
  %v1172 = vsub.s32 0, %v1171
  %v1173 = vrot.slane %v1068, %v1172
  %v1174 = vlaneseq
  %v1175 = vshrl.u32 %v1174, 7
  %v1176 = vsub.s32 0, %v1175
  %v1177 = vrot.slane %v1069, %v1176
  %v1178 = vlaneseq
  %v1179 = vshrl.u32 %v1178, 7
  %v1180 = vsub.s32 0, %v1179
  %v1181 = vrot.slane %v1070, %v1180
  %v1182 = vlaneseq
  %v1183 = vshrl.u32 %v1182, 7
  %v1184 = vsub.s32 0, %v1183
  %v1185 = vrot.slane %v1071, %v1184
  %v1186 = vlaneseq
  %v1187 = vshrl.u32 %v1186, 7
  %v1188 = vsub.s32 0, %v1187
  %v1189 = vrot.slane %v1072, %v1188
  %v1190 = vlaneseq
  %v1191 = vshrl.u32 %v1190, 7
  %v1192 = vsub.s32 0, %v1191
  %v1193 = vrot.slane %v1073, %v1192
  %v1194 = vmul.f32 %v1133, %v1114
  %v1195 = vmul.f32 %v1137, %v1114
  %v1196 = vmul.f32 %v1141, %v1114
  %v1197 = vmul.f32 %v1145, %v1114
  %v1198 = vmul.f32 %v1149, %v1114
  %v1199 = vmul.f32 %v1153, %v1114
  %v1200 = vmul.f32 %v1157, %v1114
  %v1201 = vmul.f32 %v1161, %v1114
  %v1202 = vmul.f32 %v1165, %v1122
  %v1203 = vmul.f32 %v1169, %v1122
  %v1204 = vmul.f32 %v1173, %v1122
  %v1205 = vmul.f32 %v1177, %v1122
  %v1206 = vmul.f32 %v1181, %v1122
  %v1207 = vmul.f32 %v1185, %v1122
  %v1208 = vmul.f32 %v1189, %v1122
  %v1209 = vmul.f32 %v1193, %v1122
  %v1210 = vlaneseq
  %v1211 = vshrl.u32 %v1210, 7
  %v1212 = vsub.s32 1, %v1211
  %v1213 = vrot.slane %v1058, %v1212
  %v1214 = vlaneseq
  %v1215 = vshrl.u32 %v1214, 7
  %v1216 = vsub.s32 1, %v1215
  %v1217 = vrot.slane %v1059, %v1216
  %v1218 = vlaneseq
  %v1219 = vshrl.u32 %v1218, 7
  %v1220 = vsub.s32 1, %v1219
  %v1221 = vrot.slane %v1060, %v1220
  %v1222 = vlaneseq
  %v1223 = vshrl.u32 %v1222, 7
  %v1224 = vsub.s32 1, %v1223
  %v1225 = vrot.slane %v1061, %v1224
  %v1226 = vlaneseq
  %v1227 = vshrl.u32 %v1226, 7
  %v1228 = vsub.s32 1, %v1227
  %v1229 = vrot.slane %v1062, %v1228
  %v1230 = vlaneseq
  %v1231 = vshrl.u32 %v1230, 7
  %v1232 = vsub.s32 1, %v1231
  %v1233 = vrot.slane %v1063, %v1232
  %v1234 = vlaneseq
  %v1235 = vshrl.u32 %v1234, 7
  %v1236 = vsub.s32 1, %v1235
  %v1237 = vrot.slane %v1064, %v1236
  %v1238 = vlaneseq
  %v1239 = vshrl.u32 %v1238, 7
  %v1240 = vsub.s32 1, %v1239
  %v1241 = vrot.slane %v1065, %v1240
  %v1242 = vlaneseq
  %v1243 = vshrl.u32 %v1242, 7
  %v1244 = vsub.s32 1, %v1243
  %v1245 = vrot.slane %v1066, %v1244
  %v1246 = vlaneseq
  %v1247 = vshrl.u32 %v1246, 7
  %v1248 = vsub.s32 1, %v1247
  %v1249 = vrot.slane %v1067, %v1248
  %v1250 = vlaneseq
  %v1251 = vshrl.u32 %v1250, 7
  %v1252 = vsub.s32 1, %v1251
  %v1253 = vrot.slane %v1068, %v1252
  %v1254 = vlaneseq
  %v1255 = vshrl.u32 %v1254, 7
  %v1256 = vsub.s32 1, %v1255
  %v1257 = vrot.slane %v1069, %v1256
  %v1258 = vlaneseq
  %v1259 = vshrl.u32 %v1258, 7
  %v1260 = vsub.s32 1, %v1259
  %v1261 = vrot.slane %v1070, %v1260
  %v1262 = vlaneseq
  %v1263 = vshrl.u32 %v1262, 7
  %v1264 = vsub.s32 1, %v1263
  %v1265 = vrot.slane %v1071, %v1264
  %v1266 = vlaneseq
  %v1267 = vshrl.u32 %v1266, 7
  %v1268 = vsub.s32 1, %v1267
  %v1269 = vrot.slane %v1072, %v1268
  %v1270 = vlaneseq
  %v1271 = vshrl.u32 %v1270, 7
  %v1272 = vsub.s32 1, %v1271
  %v1273 = vrot.slane %v1073, %v1272
  %v1274 = vmul.f32 %v1213, %v1115
  %v1275 = vmul.f32 %v1217, %v1115
  %v1276 = vmul.f32 %v1221, %v1115
  %v1277 = vmul.f32 %v1225, %v1115
  %v1278 = vmul.f32 %v1229, %v1115
  %v1279 = vmul.f32 %v1233, %v1115
  %v1280 = vmul.f32 %v1237, %v1115
  %v1281 = vmul.f32 %v1241, %v1115
  %v1282 = vmul.f32 %v1245, %v1123
  %v1283 = vmul.f32 %v1249, %v1123
  %v1284 = vmul.f32 %v1253, %v1123
  %v1285 = vmul.f32 %v1257, %v1123
  %v1286 = vmul.f32 %v1261, %v1123
  %v1287 = vmul.f32 %v1265, %v1123
  %v1288 = vmul.f32 %v1269, %v1123
  %v1289 = vmul.f32 %v1273, %v1123
  %v1290 = vadd.f32 %v1194, %v1274
  %v1291 = vadd.f32 %v1195, %v1275
  %v1292 = vadd.f32 %v1196, %v1276
  %v1293 = vadd.f32 %v1197, %v1277
  %v1294 = vadd.f32 %v1198, %v1278
  %v1295 = vadd.f32 %v1199, %v1279
  %v1296 = vadd.f32 %v1200, %v1280
  %v1297 = vadd.f32 %v1201, %v1281
  %v1298 = vadd.f32 %v1202, %v1282
  %v1299 = vadd.f32 %v1203, %v1283
  %v1300 = vadd.f32 %v1204, %v1284
  %v1301 = vadd.f32 %v1205, %v1285
  %v1302 = vadd.f32 %v1206, %v1286
  %v1303 = vadd.f32 %v1207, %v1287
  %v1304 = vadd.f32 %v1208, %v1288
  %v1305 = vadd.f32 %v1209, %v1289
  %v1306 = vlaneseq
  %v1307 = vshrl.u32 %v1306, 7
  %v1308 = vsub.s32 2, %v1307
  %v1309 = vrot.slane %v1058, %v1308
  %v1310 = vlaneseq
  %v1311 = vshrl.u32 %v1310, 7
  %v1312 = vsub.s32 2, %v1311
  %v1313 = vrot.slane %v1059, %v1312
  %v1314 = vlaneseq
  %v1315 = vshrl.u32 %v1314, 7
  %v1316 = vsub.s32 2, %v1315
  %v1317 = vrot.slane %v1060, %v1316
  %v1318 = vlaneseq
  %v1319 = vshrl.u32 %v1318, 7
  %v1320 = vsub.s32 2, %v1319
  %v1321 = vrot.slane %v1061, %v1320
  %v1322 = vlaneseq
  %v1323 = vshrl.u32 %v1322, 7
  %v1324 = vsub.s32 2, %v1323
  %v1325 = vrot.slane %v1062, %v1324
  %v1326 = vlaneseq
  %v1327 = vshrl.u32 %v1326, 7
  %v1328 = vsub.s32 2, %v1327
  %v1329 = vrot.slane %v1063, %v1328
  %v1330 = vlaneseq
  %v1331 = vshrl.u32 %v1330, 7
  %v1332 = vsub.s32 2, %v1331
  %v1333 = vrot.slane %v1064, %v1332
  %v1334 = vlaneseq
  %v1335 = vshrl.u32 %v1334, 7
  %v1336 = vsub.s32 2, %v1335
  %v1337 = vrot.slane %v1065, %v1336
  %v1338 = vlaneseq
  %v1339 = vshrl.u32 %v1338, 7
  %v1340 = vsub.s32 2, %v1339
  %v1341 = vrot.slane %v1066, %v1340
  %v1342 = vlaneseq
  %v1343 = vshrl.u32 %v1342, 7
  %v1344 = vsub.s32 2, %v1343
  %v1345 = vrot.slane %v1067, %v1344
  %v1346 = vlaneseq
  %v1347 = vshrl.u32 %v1346, 7
  %v1348 = vsub.s32 2, %v1347
  %v1349 = vrot.slane %v1068, %v1348
  %v1350 = vlaneseq
  %v1351 = vshrl.u32 %v1350, 7
  %v1352 = vsub.s32 2, %v1351
  %v1353 = vrot.slane %v1069, %v1352
  %v1354 = vlaneseq
  %v1355 = vshrl.u32 %v1354, 7
  %v1356 = vsub.s32 2, %v1355
  %v1357 = vrot.slane %v1070, %v1356
  %v1358 = vlaneseq
  %v1359 = vshrl.u32 %v1358, 7
  %v1360 = vsub.s32 2, %v1359
  %v1361 = vrot.slane %v1071, %v1360
  %v1362 = vlaneseq
  %v1363 = vshrl.u32 %v1362, 7
  %v1364 = vsub.s32 2, %v1363
  %v1365 = vrot.slane %v1072, %v1364
  %v1366 = vlaneseq
  %v1367 = vshrl.u32 %v1366, 7
  %v1368 = vsub.s32 2, %v1367
  %v1369 = vrot.slane %v1073, %v1368
  %v1370 = vmul.f32 %v1309, %v1116
  %v1371 = vmul.f32 %v1313, %v1116
  %v1372 = vmul.f32 %v1317, %v1116
  %v1373 = vmul.f32 %v1321, %v1116
  %v1374 = vmul.f32 %v1325, %v1116
  %v1375 = vmul.f32 %v1329, %v1116
  %v1376 = vmul.f32 %v1333, %v1116
  %v1377 = vmul.f32 %v1337, %v1116
  %v1378 = vmul.f32 %v1341, %v1124
  %v1379 = vmul.f32 %v1345, %v1124
  %v1380 = vmul.f32 %v1349, %v1124
  %v1381 = vmul.f32 %v1353, %v1124
  %v1382 = vmul.f32 %v1357, %v1124
  %v1383 = vmul.f32 %v1361, %v1124
  %v1384 = vmul.f32 %v1365, %v1124
  %v1385 = vmul.f32 %v1369, %v1124
  %v1386 = vadd.f32 %v1290, %v1370
  %v1387 = vadd.f32 %v1291, %v1371
  %v1388 = vadd.f32 %v1292, %v1372
  %v1389 = vadd.f32 %v1293, %v1373
  %v1390 = vadd.f32 %v1294, %v1374
  %v1391 = vadd.f32 %v1295, %v1375
  %v1392 = vadd.f32 %v1296, %v1376
  %v1393 = vadd.f32 %v1297, %v1377
  %v1394 = vadd.f32 %v1298, %v1378
  %v1395 = vadd.f32 %v1299, %v1379
  %v1396 = vadd.f32 %v1300, %v1380
  %v1397 = vadd.f32 %v1301, %v1381
  %v1398 = vadd.f32 %v1302, %v1382
  %v1399 = vadd.f32 %v1303, %v1383
  %v1400 = vadd.f32 %v1304, %v1384
  %v1401 = vadd.f32 %v1305, %v1385
  %v1402 = vlaneseq
  %v1403 = vshrl.u32 %v1402, 7
  %v1404 = vsub.s32 3, %v1403
  %v1405 = vrot.slane %v1058, %v1404
  %v1406 = vlaneseq
  %v1407 = vshrl.u32 %v1406, 7
  %v1408 = vsub.s32 3, %v1407
  %v1409 = vrot.slane %v1059, %v1408
  %v1410 = vlaneseq
  %v1411 = vshrl.u32 %v1410, 7
  %v1412 = vsub.s32 3, %v1411
  %v1413 = vrot.slane %v1060, %v1412
  %v1414 = vlaneseq
  %v1415 = vshrl.u32 %v1414, 7
  %v1416 = vsub.s32 3, %v1415
  %v1417 = vrot.slane %v1061, %v1416
  %v1418 = vlaneseq
  %v1419 = vshrl.u32 %v1418, 7
  %v1420 = vsub.s32 3, %v1419
  %v1421 = vrot.slane %v1062, %v1420
  %v1422 = vlaneseq
  %v1423 = vshrl.u32 %v1422, 7
  %v1424 = vsub.s32 3, %v1423
  %v1425 = vrot.slane %v1063, %v1424
  %v1426 = vlaneseq
  %v1427 = vshrl.u32 %v1426, 7
  %v1428 = vsub.s32 3, %v1427
  %v1429 = vrot.slane %v1064, %v1428
  %v1430 = vlaneseq
  %v1431 = vshrl.u32 %v1430, 7
  %v1432 = vsub.s32 3, %v1431
  %v1433 = vrot.slane %v1065, %v1432
  %v1434 = vlaneseq
  %v1435 = vshrl.u32 %v1434, 7
  %v1436 = vsub.s32 3, %v1435
  %v1437 = vrot.slane %v1066, %v1436
  %v1438 = vlaneseq
  %v1439 = vshrl.u32 %v1438, 7
  %v1440 = vsub.s32 3, %v1439
  %v1441 = vrot.slane %v1067, %v1440
  %v1442 = vlaneseq
  %v1443 = vshrl.u32 %v1442, 7
  %v1444 = vsub.s32 3, %v1443
  %v1445 = vrot.slane %v1068, %v1444
  %v1446 = vlaneseq
  %v1447 = vshrl.u32 %v1446, 7
  %v1448 = vsub.s32 3, %v1447
  %v1449 = vrot.slane %v1069, %v1448
  %v1450 = vlaneseq
  %v1451 = vshrl.u32 %v1450, 7
  %v1452 = vsub.s32 3, %v1451
  %v1453 = vrot.slane %v1070, %v1452
  %v1454 = vlaneseq
  %v1455 = vshrl.u32 %v1454, 7
  %v1456 = vsub.s32 3, %v1455
  %v1457 = vrot.slane %v1071, %v1456
  %v1458 = vlaneseq
  %v1459 = vshrl.u32 %v1458, 7
  %v1460 = vsub.s32 3, %v1459
  %v1461 = vrot.slane %v1072, %v1460
  %v1462 = vlaneseq
  %v1463 = vshrl.u32 %v1462, 7
  %v1464 = vsub.s32 3, %v1463
  %v1465 = vrot.slane %v1073, %v1464
  %v1466 = vmul.f32 %v1405, %v1117
  %v1467 = vmul.f32 %v1409, %v1117
  %v1468 = vmul.f32 %v1413, %v1117
  %v1469 = vmul.f32 %v1417, %v1117
  %v1470 = vmul.f32 %v1421, %v1117
  %v1471 = vmul.f32 %v1425, %v1117
  %v1472 = vmul.f32 %v1429, %v1117
  %v1473 = vmul.f32 %v1433, %v1117
  %v1474 = vmul.f32 %v1437, %v1125
  %v1475 = vmul.f32 %v1441, %v1125
  %v1476 = vmul.f32 %v1445, %v1125
  %v1477 = vmul.f32 %v1449, %v1125
  %v1478 = vmul.f32 %v1453, %v1125
  %v1479 = vmul.f32 %v1457, %v1125
  %v1480 = vmul.f32 %v1461, %v1125
  %v1481 = vmul.f32 %v1465, %v1125
  %v1482 = vadd.f32 %v1386, %v1466
  %v1483 = vadd.f32 %v1387, %v1467
  %v1484 = vadd.f32 %v1388, %v1468
  %v1485 = vadd.f32 %v1389, %v1469
  %v1486 = vadd.f32 %v1390, %v1470
  %v1487 = vadd.f32 %v1391, %v1471
  %v1488 = vadd.f32 %v1392, %v1472
  %v1489 = vadd.f32 %v1393, %v1473
  %v1490 = vadd.f32 %v1394, %v1474
  %v1491 = vadd.f32 %v1395, %v1475
  %v1492 = vadd.f32 %v1396, %v1476
  %v1493 = vadd.f32 %v1397, %v1477
  %v1494 = vadd.f32 %v1398, %v1478
  %v1495 = vadd.f32 %v1399, %v1479
  %v1496 = vadd.f32 %v1400, %v1480
  %v1497 = vadd.f32 %v1401, %v1481
  %v1498 = vlaneseq
  %v1499 = vshrl.u32 %v1498, 7
  %v1500 = vsub.s32 4, %v1499
  %v1501 = vrot.slane %v1058, %v1500
  %v1502 = vlaneseq
  %v1503 = vshrl.u32 %v1502, 7
  %v1504 = vsub.s32 4, %v1503
  %v1505 = vrot.slane %v1059, %v1504
  %v1506 = vlaneseq
  %v1507 = vshrl.u32 %v1506, 7
  %v1508 = vsub.s32 4, %v1507
  %v1509 = vrot.slane %v1060, %v1508
  %v1510 = vlaneseq
  %v1511 = vshrl.u32 %v1510, 7
  %v1512 = vsub.s32 4, %v1511
  %v1513 = vrot.slane %v1061, %v1512
  %v1514 = vlaneseq
  %v1515 = vshrl.u32 %v1514, 7
  %v1516 = vsub.s32 4, %v1515
  %v1517 = vrot.slane %v1062, %v1516
  %v1518 = vlaneseq
  %v1519 = vshrl.u32 %v1518, 7
  %v1520 = vsub.s32 4, %v1519
  %v1521 = vrot.slane %v1063, %v1520
  %v1522 = vlaneseq
  %v1523 = vshrl.u32 %v1522, 7
  %v1524 = vsub.s32 4, %v1523
  %v1525 = vrot.slane %v1064, %v1524
  %v1526 = vlaneseq
  %v1527 = vshrl.u32 %v1526, 7
  %v1528 = vsub.s32 4, %v1527
  %v1529 = vrot.slane %v1065, %v1528
  %v1530 = vlaneseq
  %v1531 = vshrl.u32 %v1530, 7
  %v1532 = vsub.s32 4, %v1531
  %v1533 = vrot.slane %v1066, %v1532
  %v1534 = vlaneseq
  %v1535 = vshrl.u32 %v1534, 7
  %v1536 = vsub.s32 4, %v1535
  %v1537 = vrot.slane %v1067, %v1536
  %v1538 = vlaneseq
  %v1539 = vshrl.u32 %v1538, 7
  %v1540 = vsub.s32 4, %v1539
  %v1541 = vrot.slane %v1068, %v1540
  %v1542 = vlaneseq
  %v1543 = vshrl.u32 %v1542, 7
  %v1544 = vsub.s32 4, %v1543
  %v1545 = vrot.slane %v1069, %v1544
  %v1546 = vlaneseq
  %v1547 = vshrl.u32 %v1546, 7
  %v1548 = vsub.s32 4, %v1547
  %v1549 = vrot.slane %v1070, %v1548
  %v1550 = vlaneseq
  %v1551 = vshrl.u32 %v1550, 7
  %v1552 = vsub.s32 4, %v1551
  %v1553 = vrot.slane %v1071, %v1552
  %v1554 = vlaneseq
  %v1555 = vshrl.u32 %v1554, 7
  %v1556 = vsub.s32 4, %v1555
  %v1557 = vrot.slane %v1072, %v1556
  %v1558 = vlaneseq
  %v1559 = vshrl.u32 %v1558, 7
  %v1560 = vsub.s32 4, %v1559
  %v1561 = vrot.slane %v1073, %v1560
  %v1562 = vmul.f32 %v1501, %v1118
  %v1563 = vmul.f32 %v1505, %v1118
  %v1564 = vmul.f32 %v1509, %v1118
  %v1565 = vmul.f32 %v1513, %v1118
  %v1566 = vmul.f32 %v1517, %v1118
  %v1567 = vmul.f32 %v1521, %v1118
  %v1568 = vmul.f32 %v1525, %v1118
  %v1569 = vmul.f32 %v1529, %v1118
  %v1570 = vmul.f32 %v1533, %v1126
  %v1571 = vmul.f32 %v1537, %v1126
  %v1572 = vmul.f32 %v1541, %v1126
  %v1573 = vmul.f32 %v1545, %v1126
  %v1574 = vmul.f32 %v1549, %v1126
  %v1575 = vmul.f32 %v1553, %v1126
  %v1576 = vmul.f32 %v1557, %v1126
  %v1577 = vmul.f32 %v1561, %v1126
  %v1578 = vadd.f32 %v1482, %v1562
  %v1579 = vadd.f32 %v1483, %v1563
  %v1580 = vadd.f32 %v1484, %v1564
  %v1581 = vadd.f32 %v1485, %v1565
  %v1582 = vadd.f32 %v1486, %v1566
  %v1583 = vadd.f32 %v1487, %v1567
  %v1584 = vadd.f32 %v1488, %v1568
  %v1585 = vadd.f32 %v1489, %v1569
  %v1586 = vadd.f32 %v1490, %v1570
  %v1587 = vadd.f32 %v1491, %v1571
  %v1588 = vadd.f32 %v1492, %v1572
  %v1589 = vadd.f32 %v1493, %v1573
  %v1590 = vadd.f32 %v1494, %v1574
  %v1591 = vadd.f32 %v1495, %v1575
  %v1592 = vadd.f32 %v1496, %v1576
  %v1593 = vadd.f32 %v1497, %v1577
  %v1594 = vlaneseq
  %v1595 = vshrl.u32 %v1594, 7
  %v1596 = vsub.s32 5, %v1595
  %v1597 = vrot.slane %v1058, %v1596
  %v1598 = vlaneseq
  %v1599 = vshrl.u32 %v1598, 7
  %v1600 = vsub.s32 5, %v1599
  %v1601 = vrot.slane %v1059, %v1600
  %v1602 = vlaneseq
  %v1603 = vshrl.u32 %v1602, 7
  %v1604 = vsub.s32 5, %v1603
  %v1605 = vrot.slane %v1060, %v1604
  %v1606 = vlaneseq
  %v1607 = vshrl.u32 %v1606, 7
  %v1608 = vsub.s32 5, %v1607
  %v1609 = vrot.slane %v1061, %v1608
  %v1610 = vlaneseq
  %v1611 = vshrl.u32 %v1610, 7
  %v1612 = vsub.s32 5, %v1611
  %v1613 = vrot.slane %v1062, %v1612
  %v1614 = vlaneseq
  %v1615 = vshrl.u32 %v1614, 7
  %v1616 = vsub.s32 5, %v1615
  %v1617 = vrot.slane %v1063, %v1616
  %v1618 = vlaneseq
  %v1619 = vshrl.u32 %v1618, 7
  %v1620 = vsub.s32 5, %v1619
  %v1621 = vrot.slane %v1064, %v1620
  %v1622 = vlaneseq
  %v1623 = vshrl.u32 %v1622, 7
  %v1624 = vsub.s32 5, %v1623
  %v1625 = vrot.slane %v1065, %v1624
  %v1626 = vlaneseq
  %v1627 = vshrl.u32 %v1626, 7
  %v1628 = vsub.s32 5, %v1627
  %v1629 = vrot.slane %v1066, %v1628
  %v1630 = vlaneseq
  %v1631 = vshrl.u32 %v1630, 7
  %v1632 = vsub.s32 5, %v1631
  %v1633 = vrot.slane %v1067, %v1632
  %v1634 = vlaneseq
  %v1635 = vshrl.u32 %v1634, 7
  %v1636 = vsub.s32 5, %v1635
  %v1637 = vrot.slane %v1068, %v1636
  %v1638 = vlaneseq
  %v1639 = vshrl.u32 %v1638, 7
  %v1640 = vsub.s32 5, %v1639
  %v1641 = vrot.slane %v1069, %v1640
  %v1642 = vlaneseq
  %v1643 = vshrl.u32 %v1642, 7
  %v1644 = vsub.s32 5, %v1643
  %v1645 = vrot.slane %v1070, %v1644
  %v1646 = vlaneseq
  %v1647 = vshrl.u32 %v1646, 7
  %v1648 = vsub.s32 5, %v1647
  %v1649 = vrot.slane %v1071, %v1648
  %v1650 = vlaneseq
  %v1651 = vshrl.u32 %v1650, 7
  %v1652 = vsub.s32 5, %v1651
  %v1653 = vrot.slane %v1072, %v1652
  %v1654 = vlaneseq
  %v1655 = vshrl.u32 %v1654, 7
  %v1656 = vsub.s32 5, %v1655
  %v1657 = vrot.slane %v1073, %v1656
  %v1658 = vmul.f32 %v1597, %v1119
  %v1659 = vmul.f32 %v1601, %v1119
  %v1660 = vmul.f32 %v1605, %v1119
  %v1661 = vmul.f32 %v1609, %v1119
  %v1662 = vmul.f32 %v1613, %v1119
  %v1663 = vmul.f32 %v1617, %v1119
  %v1664 = vmul.f32 %v1621, %v1119
  %v1665 = vmul.f32 %v1625, %v1119
  %v1666 = vmul.f32 %v1629, %v1127
  %v1667 = vmul.f32 %v1633, %v1127
  %v1668 = vmul.f32 %v1637, %v1127
  %v1669 = vmul.f32 %v1641, %v1127
  %v1670 = vmul.f32 %v1645, %v1127
  %v1671 = vmul.f32 %v1649, %v1127
  %v1672 = vmul.f32 %v1653, %v1127
  %v1673 = vmul.f32 %v1657, %v1127
  %v1674 = vadd.f32 %v1578, %v1658
  %v1675 = vadd.f32 %v1579, %v1659
  %v1676 = vadd.f32 %v1580, %v1660
  %v1677 = vadd.f32 %v1581, %v1661
  %v1678 = vadd.f32 %v1582, %v1662
  %v1679 = vadd.f32 %v1583, %v1663
  %v1680 = vadd.f32 %v1584, %v1664
  %v1681 = vadd.f32 %v1585, %v1665
  %v1682 = vadd.f32 %v1586, %v1666
  %v1683 = vadd.f32 %v1587, %v1667
  %v1684 = vadd.f32 %v1588, %v1668
  %v1685 = vadd.f32 %v1589, %v1669
  %v1686 = vadd.f32 %v1590, %v1670
  %v1687 = vadd.f32 %v1591, %v1671
  %v1688 = vadd.f32 %v1592, %v1672
  %v1689 = vadd.f32 %v1593, %v1673
  %v1690 = vlaneseq
  %v1691 = vshrl.u32 %v1690, 7
  %v1692 = vsub.s32 6, %v1691
  %v1693 = vrot.slane %v1058, %v1692
  %v1694 = vlaneseq
  %v1695 = vshrl.u32 %v1694, 7
  %v1696 = vsub.s32 6, %v1695
  %v1697 = vrot.slane %v1059, %v1696
  %v1698 = vlaneseq
  %v1699 = vshrl.u32 %v1698, 7
  %v1700 = vsub.s32 6, %v1699
  %v1701 = vrot.slane %v1060, %v1700
  %v1702 = vlaneseq
  %v1703 = vshrl.u32 %v1702, 7
  %v1704 = vsub.s32 6, %v1703
  %v1705 = vrot.slane %v1061, %v1704
  %v1706 = vlaneseq
  %v1707 = vshrl.u32 %v1706, 7
  %v1708 = vsub.s32 6, %v1707
  %v1709 = vrot.slane %v1062, %v1708
  %v1710 = vlaneseq
  %v1711 = vshrl.u32 %v1710, 7
  %v1712 = vsub.s32 6, %v1711
  %v1713 = vrot.slane %v1063, %v1712
  %v1714 = vlaneseq
  %v1715 = vshrl.u32 %v1714, 7
  %v1716 = vsub.s32 6, %v1715
  %v1717 = vrot.slane %v1064, %v1716
  %v1718 = vlaneseq
  %v1719 = vshrl.u32 %v1718, 7
  %v1720 = vsub.s32 6, %v1719
  %v1721 = vrot.slane %v1065, %v1720
  %v1722 = vlaneseq
  %v1723 = vshrl.u32 %v1722, 7
  %v1724 = vsub.s32 6, %v1723
  %v1725 = vrot.slane %v1066, %v1724
  %v1726 = vlaneseq
  %v1727 = vshrl.u32 %v1726, 7
  %v1728 = vsub.s32 6, %v1727
  %v1729 = vrot.slane %v1067, %v1728
  %v1730 = vlaneseq
  %v1731 = vshrl.u32 %v1730, 7
  %v1732 = vsub.s32 6, %v1731
  %v1733 = vrot.slane %v1068, %v1732
  %v1734 = vlaneseq
  %v1735 = vshrl.u32 %v1734, 7
  %v1736 = vsub.s32 6, %v1735
  %v1737 = vrot.slane %v1069, %v1736
  %v1738 = vlaneseq
  %v1739 = vshrl.u32 %v1738, 7
  %v1740 = vsub.s32 6, %v1739
  %v1741 = vrot.slane %v1070, %v1740
  %v1742 = vlaneseq
  %v1743 = vshrl.u32 %v1742, 7
  %v1744 = vsub.s32 6, %v1743
  %v1745 = vrot.slane %v1071, %v1744
  %v1746 = vlaneseq
  %v1747 = vshrl.u32 %v1746, 7
  %v1748 = vsub.s32 6, %v1747
  %v1749 = vrot.slane %v1072, %v1748
  %v1750 = vlaneseq
  %v1751 = vshrl.u32 %v1750, 7
  %v1752 = vsub.s32 6, %v1751
  %v1753 = vrot.slane %v1073, %v1752
  %v1754 = vmul.f32 %v1693, %v1120
  %v1755 = vmul.f32 %v1697, %v1120
  %v1756 = vmul.f32 %v1701, %v1120
  %v1757 = vmul.f32 %v1705, %v1120
  %v1758 = vmul.f32 %v1709, %v1120
  %v1759 = vmul.f32 %v1713, %v1120
  %v1760 = vmul.f32 %v1717, %v1120
  %v1761 = vmul.f32 %v1721, %v1120
  %v1762 = vmul.f32 %v1725, %v1128
  %v1763 = vmul.f32 %v1729, %v1128
  %v1764 = vmul.f32 %v1733, %v1128
  %v1765 = vmul.f32 %v1737, %v1128
  %v1766 = vmul.f32 %v1741, %v1128
  %v1767 = vmul.f32 %v1745, %v1128
  %v1768 = vmul.f32 %v1749, %v1128
  %v1769 = vmul.f32 %v1753, %v1128
  %v1770 = vadd.f32 %v1674, %v1754
  %v1771 = vadd.f32 %v1675, %v1755
  %v1772 = vadd.f32 %v1676, %v1756
  %v1773 = vadd.f32 %v1677, %v1757
  %v1774 = vadd.f32 %v1678, %v1758
  %v1775 = vadd.f32 %v1679, %v1759
  %v1776 = vadd.f32 %v1680, %v1760
  %v1777 = vadd.f32 %v1681, %v1761
  %v1778 = vadd.f32 %v1682, %v1762
  %v1779 = vadd.f32 %v1683, %v1763
  %v1780 = vadd.f32 %v1684, %v1764
  %v1781 = vadd.f32 %v1685, %v1765
  %v1782 = vadd.f32 %v1686, %v1766
  %v1783 = vadd.f32 %v1687, %v1767
  %v1784 = vadd.f32 %v1688, %v1768
  %v1785 = vadd.f32 %v1689, %v1769
  %v1786 = vlaneseq
  %v1787 = vshrl.u32 %v1786, 7
  %v1788 = vsub.s32 7, %v1787
  %v1789 = vrot.slane %v1058, %v1788
  %v1790 = vlaneseq
  %v1791 = vshrl.u32 %v1790, 7
  %v1792 = vsub.s32 7, %v1791
  %v1793 = vrot.slane %v1059, %v1792
  %v1794 = vlaneseq
  %v1795 = vshrl.u32 %v1794, 7
  %v1796 = vsub.s32 7, %v1795
  %v1797 = vrot.slane %v1060, %v1796
  %v1798 = vlaneseq
  %v1799 = vshrl.u32 %v1798, 7
  %v1800 = vsub.s32 7, %v1799
  %v1801 = vrot.slane %v1061, %v1800
  %v1802 = vlaneseq
  %v1803 = vshrl.u32 %v1802, 7
  %v1804 = vsub.s32 7, %v1803
  %v1805 = vrot.slane %v1062, %v1804
  %v1806 = vlaneseq
  %v1807 = vshrl.u32 %v1806, 7
  %v1808 = vsub.s32 7, %v1807
  %v1809 = vrot.slane %v1063, %v1808
  %v1810 = vlaneseq
  %v1811 = vshrl.u32 %v1810, 7
  %v1812 = vsub.s32 7, %v1811
  %v1813 = vrot.slane %v1064, %v1812
  %v1814 = vlaneseq
  %v1815 = vshrl.u32 %v1814, 7
  %v1816 = vsub.s32 7, %v1815
  %v1817 = vrot.slane %v1065, %v1816
  %v1818 = vlaneseq
  %v1819 = vshrl.u32 %v1818, 7
  %v1820 = vsub.s32 7, %v1819
  %v1821 = vrot.slane %v1066, %v1820
  %v1822 = vlaneseq
  %v1823 = vshrl.u32 %v1822, 7
  %v1824 = vsub.s32 7, %v1823
  %v1825 = vrot.slane %v1067, %v1824
  %v1826 = vlaneseq
  %v1827 = vshrl.u32 %v1826, 7
  %v1828 = vsub.s32 7, %v1827
  %v1829 = vrot.slane %v1068, %v1828
  %v1830 = vlaneseq
  %v1831 = vshrl.u32 %v1830, 7
  %v1832 = vsub.s32 7, %v1831
  %v1833 = vrot.slane %v1069, %v1832
  %v1834 = vlaneseq
  %v1835 = vshrl.u32 %v1834, 7
  %v1836 = vsub.s32 7, %v1835
  %v1837 = vrot.slane %v1070, %v1836
  %v1838 = vlaneseq
  %v1839 = vshrl.u32 %v1838, 7
  %v1840 = vsub.s32 7, %v1839
  %v1841 = vrot.slane %v1071, %v1840
  %v1842 = vlaneseq
  %v1843 = vshrl.u32 %v1842, 7
  %v1844 = vsub.s32 7, %v1843
  %v1845 = vrot.slane %v1072, %v1844
  %v1846 = vlaneseq
  %v1847 = vshrl.u32 %v1846, 7
  %v1848 = vsub.s32 7, %v1847
  %v1849 = vrot.slane %v1073, %v1848
  %v1850 = vmul.f32 %v1789, %v1121
  %v1851 = vmul.f32 %v1793, %v1121
  %v1852 = vmul.f32 %v1797, %v1121
  %v1853 = vmul.f32 %v1801, %v1121
  %v1854 = vmul.f32 %v1805, %v1121
  %v1855 = vmul.f32 %v1809, %v1121
  %v1856 = vmul.f32 %v1813, %v1121
  %v1857 = vmul.f32 %v1817, %v1121
  %v1858 = vmul.f32 %v1821, %v1129
  %v1859 = vmul.f32 %v1825, %v1129
  %v1860 = vmul.f32 %v1829, %v1129
  %v1861 = vmul.f32 %v1833, %v1129
  %v1862 = vmul.f32 %v1837, %v1129
  %v1863 = vmul.f32 %v1841, %v1129
  %v1864 = vmul.f32 %v1845, %v1129
  %v1865 = vmul.f32 %v1849, %v1129
  %v1866 = vadd.f32 %v1770, %v1850
  %v1867 = vadd.f32 %v1771, %v1851
  %v1868 = vadd.f32 %v1772, %v1852
  %v1869 = vadd.f32 %v1773, %v1853
  %v1870 = vadd.f32 %v1774, %v1854
  %v1871 = vadd.f32 %v1775, %v1855
  %v1872 = vadd.f32 %v1776, %v1856
  %v1873 = vadd.f32 %v1777, %v1857
  %v1874 = vadd.f32 %v1778, %v1858
  %v1875 = vadd.f32 %v1779, %v1859
  %v1876 = vadd.f32 %v1780, %v1860
  %v1877 = vadd.f32 %v1781, %v1861
  %v1878 = vadd.f32 %v1782, %v1862
  %v1879 = vadd.f32 %v1783, %v1863
  %v1880 = vadd.f32 %v1784, %v1864
  %v1881 = vadd.f32 %v1785, %v1865
  %v1882 = vmul.f32 %v1866, %v1077
  %v1883 = vmul.f32 %v1867, %v1081
  %v1884 = vmul.f32 %v1868, %v1085
  %v1885 = vmul.f32 %v1869, %v1089
  %v1886 = vmul.f32 %v1870, %v1093
  %v1887 = vmul.f32 %v1871, %v1097
  %v1888 = vmul.f32 %v1872, %v1101
  %v1889 = vmul.f32 %v1873, %v1105
  %v1890 = vmul.f32 %v1874, %v1077
  %v1891 = vmul.f32 %v1875, %v1081
  %v1892 = vmul.f32 %v1876, %v1085
  %v1893 = vmul.f32 %v1877, %v1089
  %v1894 = vmul.f32 %v1878, %v1093
  %v1895 = vmul.f32 %v1879, %v1097
  %v1896 = vmul.f32 %v1880, %v1101
  %v1897 = vmul.f32 %v1881, %v1105
  %v1898 = vmul.f32 %v1882, %v157
  %v1899 = vmul.f32 %v1883, %v161
  %v1900 = vmul.f32 %v1884, %v165
  %v1901 = vmul.f32 %v1885, %v169
  %v1902 = vmul.f32 %v1886, %v173
  %v1903 = vmul.f32 %v1887, %v177
  %v1904 = vmul.f32 %v1888, %v181
  %v1905 = vmul.f32 %v1889, %v185
  %v1906 = vmul.f32 %v1890, %v157
  %v1907 = vmul.f32 %v1891, %v161
  %v1908 = vmul.f32 %v1892, %v165
  %v1909 = vmul.f32 %v1893, %v169
  %v1910 = vmul.f32 %v1894, %v173
  %v1911 = vmul.f32 %v1895, %v177
  %v1912 = vmul.f32 %v1896, %v181
  %v1913 = vmul.f32 %v1897, %v185
  %vm1914 = vcmask 125952
  %1915 = vst.msk [vmem:[%s5] sm:$0xf] %vm1914, %v1898
  %1916 = vst.msk [vmem:[%s5 + $0x4] sm:$0xf] %vm1914, %v1899
  %1917 = vst.msk [vmem:[%s5 + $0x8] sm:$0xf] %vm1914, %v1900
  %1918 = vst.msk [vmem:[%s5 + $0xc] sm:$0xf] %vm1914, %v1901
  %1919 = vst.msk [vmem:[%s5 + $0x10] sm:$0xf] %vm1914, %v1902
  %1920 = vst.msk [vmem:[%s5 + $0x14] sm:$0xf] %vm1914, %v1903
  %1921 = vst.msk [vmem:[%s5 + $0x18] sm:$0xf] %vm1914, %v1904
  %1922 = vst.msk [vmem:[%s5 + $0x1c] sm:$0xf] %vm1914, %v1905
  %1923 = vst.msk [vmem:[%s5 + $0x20] sm:$0xf] %vm1914, %v1906
  %1924 = vst.msk [vmem:[%s5 + $0x24] sm:$0xf] %vm1914, %v1907
  %1925 = vst.msk [vmem:[%s5 + $0x28] sm:$0xf] %vm1914, %v1908
  %1926 = vst.msk [vmem:[%s5 + $0x2c] sm:$0xf] %vm1914, %v1909
  %1927 = vst.msk [vmem:[%s5 + $0x30] sm:$0xf] %vm1914, %v1910
  %1928 = vst.msk [vmem:[%s5 + $0x34] sm:$0xf] %vm1914, %v1911
  %1929 = vst.msk [vmem:[%s5 + $0x38] sm:$0xf] %vm1914, %v1912
  %1930 = vst.msk [vmem:[%s5 + $0x3c] sm:$0xf] %vm1914, %v1913
  // Predicated region
  $region22: #{sp_intra_att_v3.4} parent=0 // pred_check
    _
  $region23: #{sp_intra_att_v3.4} parent=0 // pred_check_branch
    %1932 = sbr.rel (0) target = $region25
  $region24: #{sp_intra_att_v3.4} parent=0 // pred_region
    _
  $region25: #{sp_intra_att_v3.4} parent=0 // pred_fallthru
    _
  // Predicated region
  $region26: #{sp_intra_att_v3.4} parent=0 // pred_check
    _
  $region27: #{sp_intra_att_v3.4} parent=0 // pred_check_branch
    %1934 = sbr.rel (0) target = $region29
  $region28: #{sp_intra_att_v3.4} parent=0 // pred_region
    _
  $region29: #{sp_intra_att_v3.4} parent=0 // pred_fallthru
    _

</llo_original>
